<compile_context>
chip_gen: v7x
topology: tpu7x:2x2x1
jax: 0.10.0
libtpu: 0.0.40
codegen_flags: <defaults>
</compile_context>

<pallas_src>
import jax
import jax.numpy as jnp
from jax.experimental import pallas as pl
from jax.experimental.pallas import tpu as pltpu

PATCH = 14
IN_FEATURES = 588      # 3 * 14 * 14
OUT_FEATURES = 1152    # 9 * 128 -> lane-dense output


def patch_embed_kernel(x_ref, w_ref, b_ref, o_ref):
    # x_ref: (TM, 588)   bf16 tile of patch-flattened tokens
    # w_ref: (588, 1152) bf16 weight (resident: constant index_map, Buffered(1))
    # b_ref: (1, 1152)   f32 bias (resident)
    # o_ref: (TM, 1152)  output tile (f32 by default, bf16 optional)
    acc = jnp.dot(x_ref[...], w_ref[...], preferred_element_type=jnp.float32)
    o_ref[...] = (acc + b_ref[...]).astype(o_ref.dtype)


def linear_patch_embedding(x, weight, bias, *, out_dtype=jnp.float32, tm=None):
    """x: (B, C, h*14, w*14) f32.  weight: (1152, 588) torch layout.  bias: (1152,)."""
    B, C, Hp, Wp = x.shape
    assert Hp % PATCH == 0 and Wp % PATCH == 0
    h, w = Hp // PATCH, Wp // PATCH
    N = h * w
    K = C * PATCH * PATCH
    assert K == weight.shape[1] == IN_FEATURES
    assert weight.shape[0] == OUT_FEATURES
    M = B * N

    # Cast to bf16 BEFORE the patchify permute so the wrapper layout pass (pure
    # layout plumbing, matches the PyTorch reshape/permute/reshape) moves half
    # the HBM bytes.  MXU-native bf16 inputs, f32 accumulation in the kernel.
    patches = x.astype(jnp.bfloat16)
    patches = patches.reshape(B, C, h, PATCH, w, PATCH).transpose(0, 2, 4, 1, 3, 5)
    patches = patches.reshape(M, K)

    w_t = weight.astype(jnp.bfloat16).T                      # (588, 1152), for x @ W
    b2 = bias.reshape(1, OUT_FEATURES).astype(jnp.float32)   # bias add stays f32

    # Token tiling: single tile when the whole slab fits comfortably, otherwise
    # 1024-row tiles (multiple of 16 = bf16 sublane packing).  No padding needed:
    # Pallas masks the partial last output tile.
    if tm is None:
        TM = M if M <= 1024 else 1024
    else:
        TM = tm
    num_tiles = pl.cdiv(M, TM)

    out_itemsize = jnp.dtype(out_dtype).itemsize
    cost = pl.CostEstimate(
        flops=2 * M * K * OUT_FEATURES,
        transcendentals=0,
        bytes_accessed=(M * K * 2                    # bf16 activations
                        + K * OUT_FEATURES * 2       # bf16 weight (read once)
                        + OUT_FEATURES * 4           # f32 bias
                        + M * OUT_FEATURES * out_itemsize),
    )

    out = pl.pallas_call(
        patch_embed_kernel,
        out_shape=jax.ShapeDtypeStruct((M, OUT_FEATURES), out_dtype),
        grid=(num_tiles,),
        in_specs=[
            # Token tile marches along the grid axis.
            pl.BlockSpec((TM, K), lambda i: (i, 0)),
            # Weight / bias: constant index_map -> staged into VMEM once and kept
            # resident; Buffered(1) avoids pointless double-buffer VMEM.
            pl.BlockSpec((K, OUT_FEATURES), lambda i: (0, 0),
                         pipeline_mode=pl.Buffered(1)),
            pl.BlockSpec((1, OUT_FEATURES), lambda i: (0, 0),
                         pipeline_mode=pl.Buffered(1)),
        ],
        out_specs=pl.BlockSpec((TM, OUT_FEATURES), lambda i: (i, 0)),
        compiler_params=pltpu.CompilerParams(
            # Independent token tiles: shard across v7x's 2 TCs when there is
            # actually more than one tile; otherwise keep it on one core.
            dimension_semantics=("parallel",) if num_tiles > 1 else ("arbitrary",),
            # ~13-14 MB working set at TM=1024 (x 2x1.2MB, out 2x4.6MB, w 1.35MB);
            # 32 MiB is safe on v5e/v6e/v7x and covers v5e's 16 MiB default.
            vmem_limit_bytes=32 * 1024 * 1024,
        ),
        cost_estimate=cost,
    )(patches, w_t, b2)

    return out.reshape(B, N, OUT_FEATURES)


def _reference(x, weight, bias):
    B, C, Hp, Wp = x.shape
    h, w = Hp // PATCH, Wp // PATCH
    p = x.reshape(B, C, h, PATCH, w, PATCH).transpose(0, 2, 4, 1, 3, 5)
    p = p.reshape(B, h * w, C * PATCH * PATCH)
    return p @ weight.T + bias


def init_params(key):
    k_w, k_b = jax.random.split(key)
    std = (2.0 / IN_FEATURES) ** 0.5
    weight = std * jax.random.normal(k_w, (OUT_FEATURES, IN_FEATURES), dtype=jnp.float32)
    bias = 0.01 * jax.random.normal(k_b, (OUT_FEATURES,), dtype=jnp.float32)
    return weight, bias


if __name__ == "__main__":
    key = jax.random.PRNGKey(0)
    k_x, k_p, k_x2 = jax.random.split(key, 3)
    weight, bias = init_params(k_p)

    # Case 1: small single-tile path.  B=2, C=3, 28x28 -> 2x2 = 4 patches, M=8 tokens.
    B, C, Hp, Wp = 2, 3, 28, 28
    x = jax.random.normal(k_x, (B, C, Hp, Wp), dtype=jnp.float32)
    out = jax.block_until_ready(linear_patch_embedding(x, weight, bias))
    assert out.shape == (B, (Hp // PATCH) * (Wp // PATCH), OUT_FEATURES)
    assert out.dtype == jnp.float32
    ref = _reference(x, weight, bias)
    rel_err = jnp.max(jnp.abs(out - ref)) / (jnp.max(jnp.abs(ref)) + 1e-6)
    assert float(rel_err) < 2e-2, f"relative error too large: {float(rel_err)}"

    # Case 2: multi-tile path with a write-masked partial last tile (no padding):
    # B=2, 42x42 -> 3x3 = 9 patches, M=18 tokens, forced TM=16 -> grid=(2,), last
    # tile has only 2 valid rows.
    B2, Hp2, Wp2 = 2, 42, 42
    x2 = jax.random.normal(k_x2, (B2, C, Hp2, Wp2), dtype=jnp.float32)
    out2 = jax.block_until_ready(linear_patch_embedding(x2, weight, bias, tm=16))
    assert out2.shape == (B2, 9, OUT_FEATURES)
    ref2 = _reference(x2, weight, bias)
    rel_err2 = jnp.max(jnp.abs(out2 - ref2)) / (jnp.max(jnp.abs(ref2)) + 1e-6)
    assert float(rel_err2) < 2e-2, f"relative error too large: {float(rel_err2)}"

    print("KERNEL_OK")
</pallas_src>

<mosaic_0001>
module attributes {stable_mosaic.version = 11 : i64} {
  func.func @patch_embed_kernel(%arg0: i32, %arg1: memref<8x588xbf16, #tpu.memory_space<vmem>>, %arg2: memref<588x1152xbf16, #tpu.memory_space<vmem>>, %arg3: memref<1x1152xf32, #tpu.memory_space<vmem>>, %arg4: memref<8x1152xf32, #tpu.memory_space<vmem>>) attributes {dimension_semantics = [#tpu.dimension_semantics<arbitrary>], iteration_bounds = array<i64: 1>, scalar_prefetch = 0 : i64, scratch_operands = 0 : i64, tpu.core_type = #tpu.core_type<tc>, window_params = [{transform_indices = @transform_0, window_bounds = array<i64: 8, 588>}, {pipeline_mode = #tpu.pipeline_mode<synchronous>, transform_indices = @transform_1, window_bounds = array<i64: 588, 1152>}, {pipeline_mode = #tpu.pipeline_mode<synchronous>, transform_indices = @transform_2, window_bounds = array<i64: 1, 1152>}, {transform_indices = @transform_3, window_bounds = array<i64: 8, 1152>}]} {
    %c0 = arith.constant 0 : index
    %c0_0 = arith.constant 0 : index
    %0 = vector.load %arg1[%c0, %c0_0] : memref<8x588xbf16, #tpu.memory_space<vmem>>, vector<8x588xbf16>
    %c0_1 = arith.constant 0 : index
    %c0_2 = arith.constant 0 : index
    %1 = vector.load %arg2[%c0_1, %c0_2] : memref<588x1152xbf16, #tpu.memory_space<vmem>>, vector<588x1152xbf16>
    %cst = arith.constant dense<0.000000e+00> : vector<8x1152xf32>
    %2 = tpu.matmul %0, %1, %cst {dimension_numbers = #tpu.dot_dimension_numbers<[1], [0], [0], [1], [0, 0, 1, 1], [], []>} : vector<8x588xbf16>, vector<588x1152xbf16>, vector<8x1152xf32> -> vector<8x1152xf32>
    %c0_3 = arith.constant 0 : index
    %c0_4 = arith.constant 0 : index
    %3 = vector.load %arg3[%c0_3, %c0_4] : memref<1x1152xf32, #tpu.memory_space<vmem>>, vector<1x1152xf32>
    %4 = vector.broadcast %3 : vector<1x1152xf32> to vector<8x1152xf32>
    %5 = arith.addf %2, %4 : vector<8x1152xf32>
    %c0_5 = arith.constant 0 : index
    %c0_6 = arith.constant 0 : index
    %6 = vector.load %arg4[%c0_5, %c0_6] : memref<8x1152xf32, #tpu.memory_space<vmem>>, vector<8x1152xf32>
    tpu.vector_store %arg4[%c0_5, %c0_6], %5 {strides = array<i32>} : memref<8x1152xf32, #tpu.memory_space<vmem>>, vector<8x1152xf32>,
    return
  }
  func.func @transform_0(%arg0: i32) -> (i32, i32) {
    %c0_i32 = arith.constant 0 : i32
    %c0_i32_0 = arith.constant 0 : i32
    return %arg0, %c0_i32 : i32, i32
  }
  func.func @transform_1(%arg0: i32) -> (i32, i32) {
    %c0_i32 = arith.constant 0 : i32
    %c0_i32_0 = arith.constant 0 : i32
    %c0_i32_1 = arith.constant 0 : i32
    return %c0_i32, %c0_i32_0 : i32, i32
  }
  func.func @transform_2(%arg0: i32) -> (i32, i32) {
    %c0_i32 = arith.constant 0 : i32
    %c0_i32_0 = arith.constant 0 : i32
    %c0_i32_1 = arith.constant 0 : i32
    return %c0_i32, %c0_i32_0 : i32, i32
  }
  func.func @transform_3(%arg0: i32) -> (i32, i32) {
    %c0_i32 = arith.constant 0 : i32
    %c0_i32_0 = arith.constant 0 : i32
    return %arg0, %c0_i32 : i32, i32
  }
}

</mosaic_0001>

<llo_original>
// kernel: tpu_custom_call.1
$region0: #{tpu_custom_call.1}
  #allocation0 [shape = 'u32[]', space=smem, size = 0x4, offset = 0x4, fixed_abs, tag = 'smem constant byte address 0x4 - core index']
  #allocation1 [shape = 'u32[144,128]{1,0:T(1,128)}', space=vmem, size = 0x12000, scoped, tag = 'internal scratch']
  %s0 = inlined_call_operand.hbm [shape: bf16[8,588], index: 0, kind: input, shape index: {}]
  %s1 = inlined_call_operand.hbm [shape: bf16[588,1152], index: 1, kind: input, shape index: {}]
  %s2 = inlined_call_operand.hbm [shape: f32[1,1152], index: 2, kind: input, shape index: {}]
  %s3 = inlined_call_operand.hbm [shape: f32[8,1152], index: 3, kind: output, shape index: {}]
  %s4 = sld [smem:[#allocation0]]
  $region34: #{tpu_custom_call.1} parent=0
    _
  %s6 = ssub.s32 1, %s4
  %s7 = scalar_select 0, %s6, %s4
  $region1: #{tpu_custom_call.1} parent=0
    #allocation2 [shape = 'u8[10240]{0}', space=vmem, size = 0x2800, scoped, tag = 'input window, operand 0, single buffered']
    #allocation3 [shape = 's32[1]{0}', space=sflag, size = 0x4, scoped, tag = 'scoped memory for tpu_custom_call.1']
    #allocation4 [shape = 's32[1]{0}', space=sflag, size = 0x4, scoped, tag = 'scoped memory for tpu_custom_call.1']
    #allocation5 [shape = 'u8[1363968]{0}', space=vmem, size = 0x14d000, scoped, tag = 'input window, operand 1, single buffered']
    #allocation6 [shape = 's32[1]{0}', space=sflag, size = 0x4, scoped, tag = 'scoped memory for tpu_custom_call.1']
    #allocation7 [shape = 'u8[4608]{0}', space=vmem, size = 0x1400, scoped, tag = 'input window, operand 2, single buffered']
    #allocation8 [shape = 'u8[36864]{0}', space=vmem, size = 0x9000, scoped, tag = 'output window, operand 0, single buffered']
    %8 = vsyncpa [#allocation3], 0
    %9 = vsyncpa [#allocation6], 0
    %10 = vsyncpa [#allocation4], 0
    // Predicated region
    $region2: #{tpu_custom_call.1} parent=1 // pred_check
      _
    $region3: #{tpu_custom_call.1} parent=1 // pred_check_branch
      %12 = sbr.rel (0) target = $region5
    $region4: #{tpu_custom_call.1} parent=1 // pred_region
      %s14 = ssub.s32 320, 320
      %15 = vsyncadd [#allocation3], %s14
      %s17 = sshll.u32 [#allocation2], 4
      %s18 = int_to_ptr.vmem [resolvable:$true] %s17
      %20 = dma.hbm_to_vmem [thread:$0]  %s0, 320, %s18, [#allocation3]
    $region5: #{tpu_custom_call.1} parent=1 // pred_fallthru
      _
    // Predicated region
    $region6: #{tpu_custom_call.1} parent=1 // pred_check
      _
    $region7: #{tpu_custom_call.1} parent=1 // pred_check_branch
      %22 = sbr.rel (0) target = $region9
    $region8: #{tpu_custom_call.1} parent=1 // pred_region
      %s24 = ssub.s32 42624, 42624
      %25 = vsyncadd [#allocation6], %s24
      %s26 = sshll.u32 [#allocation5], 4
      %s27 = int_to_ptr.vmem [resolvable:$true] %s26
      %32 = dma.hbm_to_vmem [thread:$0]  %s1, 42624, %s27, [#allocation6], 576, 576, 36
    $region9: #{tpu_custom_call.1} parent=1 // pred_fallthru
      _
    // Predicated region
    $region10: #{tpu_custom_call.1} parent=1 // pred_check
      _
    $region11: #{tpu_custom_call.1} parent=1 // pred_check_branch
      %34 = sbr.rel (0) target = $region13
    $region12: #{tpu_custom_call.1} parent=1 // pred_region
      %s36 = ssub.s32 144, 144
      %37 = vsyncadd [#allocation6], %s36
      %s39 = sshll.u32 [#allocation7], 4
      %s40 = int_to_ptr.vmem [resolvable:$true] %s39
      %42 = dma.hbm_to_vmem [thread:$0]  %s2, 144, %s40, [#allocation6]
    $region13: #{tpu_custom_call.1} parent=1 // pred_fallthru
      _
    // Predicated region
    $region14: #{tpu_custom_call.1} parent=1 // pred_check
      _
    $region15: #{tpu_custom_call.1} parent=1 // pred_check_branch
      %44 = sbr.rel (0) target = $region17
    $region16: #{tpu_custom_call.1} parent=1 // pred_region
      %45 = dma.done [#allocation3], 320
    $region17: #{tpu_custom_call.1} parent=1 // pred_fallthru
      _
    // Predicated region
    $region18: #{tpu_custom_call.1} parent=1 // pred_check
      _
    $region19: #{tpu_custom_call.1} parent=1 // pred_check_branch
      %47 = sbr.rel (0) target = $region21
    $region20: #{tpu_custom_call.1} parent=1 // pred_region
      %48 = dma.done [#allocation6], 42624
    $region21: #{tpu_custom_call.1} parent=1 // pred_fallthru
      _
    // Predicated region
    $region22: #{tpu_custom_call.1} parent=1 // pred_check
      _
    $region23: #{tpu_custom_call.1} parent=1 // pred_check_branch
      %50 = sbr.rel (0) target = $region25
    $region24: #{tpu_custom_call.1} parent=1 // pred_region
      %51 = dma.done [#allocation6], 144
    $region25: #{tpu_custom_call.1} parent=1 // pred_fallthru
      _
    %v53 = vld [vmem:[#allocation2] sm:$0xff]
    %v54 = vld [vmem:[#allocation2 + $0x8] sm:$0xff]
    %v55 = vld [vmem:[#allocation2 + $0x10] sm:$0xf]
    %v56 = vld [vmem:[#allocation5] sm:$0xff]
    %v57 = vld [vmem:[#allocation5 + $0x8] sm:$0xff]
    %v58 = vld [vmem:[#allocation5 + $0x10] sm:$0xff]
    %v59 = vld [vmem:[#allocation5 + $0x18] sm:$0xff]
    %v60 = vld [vmem:[#allocation5 + $0x20] sm:$0xf]
    %v61 = vld [vmem:[#allocation5 + $0x24] sm:$0xff]
    %v62 = vld [vmem:[#allocation5 + $0x2c] sm:$0xff]
    %v63 = vld [vmem:[#allocation5 + $0x34] sm:$0xff]
    %v64 = vld [vmem:[#allocation5 + $0x3c] sm:$0xff]
    %v65 = vld [vmem:[#allocation5 + $0x44] sm:$0xf]
    %v66 = vld [vmem:[#allocation5 + $0x48] sm:$0xff]
    %v67 = vld [vmem:[#allocation5 + $0x50] sm:$0xff]
    %v68 = vld [vmem:[#allocation5 + $0x58] sm:$0xff]
    %v69 = vld [vmem:[#allocation5 + $0x60] sm:$0xff]
    %v70 = vld [vmem:[#allocation5 + $0x68] sm:$0xf]
    %v71 = vld [vmem:[#allocation5 + $0x6c] sm:$0xff]
    %v72 = vld [vmem:[#allocation5 + $0x74] sm:$0xff]
    %v73 = vld [vmem:[#allocation5 + $0x7c] sm:$0xff]
    %v74 = vld [vmem:[#allocation5 + $0x84] sm:$0xff]
    %v75 = vld [vmem:[#allocation5 + $0x8c] sm:$0xf]
    %v76 = vld [vmem:[#allocation5 + $0x90] sm:$0xff]
    %v77 = vld [vmem:[#allocation5 + $0x98] sm:$0xff]
    %v78 = vld [vmem:[#allocation5 + $0xa0] sm:$0xff]
    %v79 = vld [vmem:[#allocation5 + $0xa8] sm:$0xff]
    %v80 = vld [vmem:[#allocation5 + $0xb0] sm:$0xf]
    %v81 = vld [vmem:[#allocation5 + $0xb4] sm:$0xff]
    %v82 = vld [vmem:[#allocation5 + $0xbc] sm:$0xff]
    %v83 = vld [vmem:[#allocation5 + $0xc4] sm:$0xff]
    %v84 = vld [vmem:[#allocation5 + $0xcc] sm:$0xff]
    %v85 = vld [vmem:[#allocation5 + $0xd4] sm:$0xf]
    %v86 = vld [vmem:[#allocation5 + $0xd8] sm:$0xff]
    %v87 = vld [vmem:[#allocation5 + $0xe0] sm:$0xff]
    %v88 = vld [vmem:[#allocation5 + $0xe8] sm:$0xff]
    %v89 = vld [vmem:[#allocation5 + $0xf0] sm:$0xff]
    %v90 = vld [vmem:[#allocation5 + $0xf8] sm:$0xf]
    %v91 = vld [vmem:[#allocation5 + $0xfc] sm:$0xff]
    %v92 = vld [vmem:[#allocation5 + $0x104] sm:$0xff]
    %v93 = vld [vmem:[#allocation5 + $0x10c] sm:$0xff]
    %v94 = vld [vmem:[#allocation5 + $0x114] sm:$0xff]
    %v95 = vld [vmem:[#allocation5 + $0x11c] sm:$0xf]
    %v96 = vld [vmem:[#allocation5 + $0x120] sm:$0xff]
    %v97 = vld [vmem:[#allocation5 + $0x128] sm:$0xff]
    %v98 = vld [vmem:[#allocation5 + $0x130] sm:$0xff]
    %v99 = vld [vmem:[#allocation5 + $0x138] sm:$0xff]
    %v100 = vld [vmem:[#allocation5 + $0x140] sm:$0xf]
    %v101 = vld [vmem:[#allocation5 + $0x144] sm:$0xff]
    %v102 = vld [vmem:[#allocation5 + $0x14c] sm:$0xff]
    %v103 = vld [vmem:[#allocation5 + $0x154] sm:$0xff]
    %v104 = vld [vmem:[#allocation5 + $0x15c] sm:$0xff]
    %v105 = vld [vmem:[#allocation5 + $0x164] sm:$0xf]
    %v106 = vld [vmem:[#allocation5 + $0x168] sm:$0xff]
    %v107 = vld [vmem:[#allocation5 + $0x170] sm:$0xff]
    %v108 = vld [vmem:[#allocation5 + $0x178] sm:$0xff]
    %v109 = vld [vmem:[#allocation5 + $0x180] sm:$0xff]
    %v110 = vld [vmem:[#allocation5 + $0x188] sm:$0xf]
    %v111 = vld [vmem:[#allocation5 + $0x18c] sm:$0xff]
    %v112 = vld [vmem:[#allocation5 + $0x194] sm:$0xff]
    %v113 = vld [vmem:[#allocation5 + $0x19c] sm:$0xff]
    %v114 = vld [vmem:[#allocation5 + $0x1a4] sm:$0xff]
    %v115 = vld [vmem:[#allocation5 + $0x1ac] sm:$0xf]
    %v116 = vld [vmem:[#allocation5 + $0x1b0] sm:$0xff]
    %v117 = vld [vmem:[#allocation5 + $0x1b8] sm:$0xff]
    %v118 = vld [vmem:[#allocation5 + $0x1c0] sm:$0xff]
    %v119 = vld [vmem:[#allocation5 + $0x1c8] sm:$0xff]
    %v120 = vld [vmem:[#allocation5 + $0x1d0] sm:$0xf]
    %v121 = vld [vmem:[#allocation5 + $0x1d4] sm:$0xff]
    %v122 = vld [vmem:[#allocation5 + $0x1dc] sm:$0xff]
    %v123 = vld [vmem:[#allocation5 + $0x1e4] sm:$0xff]
    %v124 = vld [vmem:[#allocation5 + $0x1ec] sm:$0xff]
    %v125 = vld [vmem:[#allocation5 + $0x1f4] sm:$0xf]
    %v126 = vld [vmem:[#allocation5 + $0x1f8] sm:$0xff]
    %v127 = vld [vmem:[#allocation5 + $0x200] sm:$0xff]
    %v128 = vld [vmem:[#allocation5 + $0x208] sm:$0xff]
    %v129 = vld [vmem:[#allocation5 + $0x210] sm:$0xff]
    %v130 = vld [vmem:[#allocation5 + $0x218] sm:$0xf]
    %v131 = vld [vmem:[#allocation5 + $0x21c] sm:$0xff]
    %v132 = vld [vmem:[#allocation5 + $0x224] sm:$0xff]
    %v133 = vld [vmem:[#allocation5 + $0x22c] sm:$0xff]
    %v134 = vld [vmem:[#allocation5 + $0x234] sm:$0xff]
    %v135 = vld [vmem:[#allocation5 + $0x23c] sm:$0xf]
    %v136 = vld [vmem:[#allocation5 + $0x240] sm:$0xff]
    %v137 = vld [vmem:[#allocation5 + $0x248] sm:$0xff]
    %v138 = vld [vmem:[#allocation5 + $0x250] sm:$0xff]
    %v139 = vld [vmem:[#allocation5 + $0x258] sm:$0xff]
    %v140 = vld [vmem:[#allocation5 + $0x260] sm:$0xf]
    %v141 = vld [vmem:[#allocation5 + $0x264] sm:$0xff]
    %v142 = vld [vmem:[#allocation5 + $0x26c] sm:$0xff]
    %v143 = vld [vmem:[#allocation5 + $0x274] sm:$0xff]
    %v144 = vld [vmem:[#allocation5 + $0x27c] sm:$0xff]
    %v145 = vld [vmem:[#allocation5 + $0x284] sm:$0xf]
    %v146 = vld [vmem:[#allocation5 + $0x288] sm:$0xff]
    %v147 = vld [vmem:[#allocation5 + $0x290] sm:$0xff]
    %v148 = vld [vmem:[#allocation5 + $0x298] sm:$0xff]
    %v149 = vld [vmem:[#allocation5 + $0x2a0] sm:$0xff]
    %v150 = vld [vmem:[#allocation5 + $0x2a8] sm:$0xf]
    %v151 = vld [vmem:[#allocation5 + $0x2ac] sm:$0xff]
    %v152 = vld [vmem:[#allocation5 + $0x2b4] sm:$0xff]
    %v153 = vld [vmem:[#allocation5 + $0x2bc] sm:$0xff]
    %v154 = vld [vmem:[#allocation5 + $0x2c4] sm:$0xff]
    %v155 = vld [vmem:[#allocation5 + $0x2cc] sm:$0xf]
    %v156 = vld [vmem:[#allocation5 + $0x2d0] sm:$0xff]
    %v157 = vld [vmem:[#allocation5 + $0x2d8] sm:$0xff]
    %v158 = vld [vmem:[#allocation5 + $0x2e0] sm:$0xff]
    %v159 = vld [vmem:[#allocation5 + $0x2e8] sm:$0xff]
    %v160 = vld [vmem:[#allocation5 + $0x2f0] sm:$0xf]
    %v161 = vld [vmem:[#allocation5 + $0x2f4] sm:$0xff]
    %v162 = vld [vmem:[#allocation5 + $0x2fc] sm:$0xff]
    %v163 = vld [vmem:[#allocation5 + $0x304] sm:$0xff]
    %v164 = vld [vmem:[#allocation5 + $0x30c] sm:$0xff]
    %v165 = vld [vmem:[#allocation5 + $0x314] sm:$0xf]
    %v166 = vld [vmem:[#allocation5 + $0x318] sm:$0xff]
    %v167 = vld [vmem:[#allocation5 + $0x320] sm:$0xff]
    %v168 = vld [vmem:[#allocation5 + $0x328] sm:$0xff]
    %v169 = vld [vmem:[#allocation5 + $0x330] sm:$0xff]
    %v170 = vld [vmem:[#allocation5 + $0x338] sm:$0xf]
    %v171 = vld [vmem:[#allocation5 + $0x33c] sm:$0xff]
    %v172 = vld [vmem:[#allocation5 + $0x344] sm:$0xff]
    %v173 = vld [vmem:[#allocation5 + $0x34c] sm:$0xff]
    %v174 = vld [vmem:[#allocation5 + $0x354] sm:$0xff]
    %v175 = vld [vmem:[#allocation5 + $0x35c] sm:$0xf]
    %v176 = vld [vmem:[#allocation5 + $0x360] sm:$0xff]
    %v177 = vld [vmem:[#allocation5 + $0x368] sm:$0xff]
    %v178 = vld [vmem:[#allocation5 + $0x370] sm:$0xff]
    %v179 = vld [vmem:[#allocation5 + $0x378] sm:$0xff]
    %v180 = vld [vmem:[#allocation5 + $0x380] sm:$0xf]
    %v181 = vld [vmem:[#allocation5 + $0x384] sm:$0xff]
    %v182 = vld [vmem:[#allocation5 + $0x38c] sm:$0xff]
    %v183 = vld [vmem:[#allocation5 + $0x394] sm:$0xff]
    %v184 = vld [vmem:[#allocation5 + $0x39c] sm:$0xff]
    %v185 = vld [vmem:[#allocation5 + $0x3a4] sm:$0xf]
    %v186 = vld [vmem:[#allocation5 + $0x3a8] sm:$0xff]
    %v187 = vld [vmem:[#allocation5 + $0x3b0] sm:$0xff]
    %v188 = vld [vmem:[#allocation5 + $0x3b8] sm:$0xff]
    %v189 = vld [vmem:[#allocation5 + $0x3c0] sm:$0xff]
    %v190 = vld [vmem:[#allocation5 + $0x3c8] sm:$0xf]
    %v191 = vld [vmem:[#allocation5 + $0x3cc] sm:$0xff]
    %v192 = vld [vmem:[#allocation5 + $0x3d4] sm:$0xff]
    %v193 = vld [vmem:[#allocation5 + $0x3dc] sm:$0xff]
    %v194 = vld [vmem:[#allocation5 + $0x3e4] sm:$0xff]
    %v195 = vld [vmem:[#allocation5 + $0x3ec] sm:$0xf]
    %v196 = vld [vmem:[#allocation5 + $0x3f0] sm:$0xff]
    %v197 = vld [vmem:[#allocation5 + $0x3f8] sm:$0xff]
    %v198 = vld [vmem:[#allocation5 + $0x400] sm:$0xff]
    %v199 = vld [vmem:[#allocation5 + $0x408] sm:$0xff]
    %v200 = vld [vmem:[#allocation5 + $0x410] sm:$0xf]
    %v201 = vld [vmem:[#allocation5 + $0x414] sm:$0xff]
    %v202 = vld [vmem:[#allocation5 + $0x41c] sm:$0xff]
    %v203 = vld [vmem:[#allocation5 + $0x424] sm:$0xff]
    %v204 = vld [vmem:[#allocation5 + $0x42c] sm:$0xff]
    %v205 = vld [vmem:[#allocation5 + $0x434] sm:$0xf]
    %v206 = vld [vmem:[#allocation5 + $0x438] sm:$0xff]
    %v207 = vld [vmem:[#allocation5 + $0x440] sm:$0xff]
    %v208 = vld [vmem:[#allocation5 + $0x448] sm:$0xff]
    %v209 = vld [vmem:[#allocation5 + $0x450] sm:$0xff]
    %v210 = vld [vmem:[#allocation5 + $0x458] sm:$0xf]
    %v211 = vld [vmem:[#allocation5 + $0x45c] sm:$0xff]
    %v212 = vld [vmem:[#allocation5 + $0x464] sm:$0xff]
    %v213 = vld [vmem:[#allocation5 + $0x46c] sm:$0xff]
    %v214 = vld [vmem:[#allocation5 + $0x474] sm:$0xff]
    %v215 = vld [vmem:[#allocation5 + $0x47c] sm:$0xf]
    %v216 = vld [vmem:[#allocation5 + $0x480] sm:$0xff]
    %v217 = vld [vmem:[#allocation5 + $0x488] sm:$0xff]
    %v218 = vld [vmem:[#allocation5 + $0x490] sm:$0xff]
    %v219 = vld [vmem:[#allocation5 + $0x498] sm:$0xff]
    %v220 = vld [vmem:[#allocation5 + $0x4a0] sm:$0xf]
    %v221 = vld [vmem:[#allocation5 + $0x4a4] sm:$0xff]
    %v222 = vld [vmem:[#allocation5 + $0x4ac] sm:$0xff]
    %v223 = vld [vmem:[#allocation5 + $0x4b4] sm:$0xff]
    %v224 = vld [vmem:[#allocation5 + $0x4bc] sm:$0xff]
    %v225 = vld [vmem:[#allocation5 + $0x4c4] sm:$0xf]
    %v226 = vld [vmem:[#allocation5 + $0x4c8] sm:$0xff]
    %v227 = vld [vmem:[#allocation5 + $0x4d0] sm:$0xff]
    %v228 = vld [vmem:[#allocation5 + $0x4d8] sm:$0xff]
    %v229 = vld [vmem:[#allocation5 + $0x4e0] sm:$0xff]
    %v230 = vld [vmem:[#allocation5 + $0x4e8] sm:$0xf]
    %v231 = vld [vmem:[#allocation5 + $0x4ec] sm:$0xff]
    %v232 = vld [vmem:[#allocation5 + $0x4f4] sm:$0xff]
    %v233 = vld [vmem:[#allocation5 + $0x4fc] sm:$0xff]
    %v234 = vld [vmem:[#allocation5 + $0x504] sm:$0xff]
    %v235 = vld [vmem:[#allocation5 + $0x50c] sm:$0xf]
    %v236 = vld [vmem:[#allocation5 + $0x510] sm:$0xff]
    %v237 = vld [vmem:[#allocation5 + $0x518] sm:$0xff]
    %v238 = vld [vmem:[#allocation5 + $0x520] sm:$0xff]
    %v239 = vld [vmem:[#allocation5 + $0x528] sm:$0xff]
    %v240 = vld [vmem:[#allocation5 + $0x530] sm:$0xf]
    %v241 = vld [vmem:[#allocation5 + $0x534] sm:$0xff]
    %v242 = vld [vmem:[#allocation5 + $0x53c] sm:$0xff]
    %v243 = vld [vmem:[#allocation5 + $0x544] sm:$0xff]
    %v244 = vld [vmem:[#allocation5 + $0x54c] sm:$0xff]
    %v245 = vld [vmem:[#allocation5 + $0x554] sm:$0xf]
    %v246 = vld [vmem:[#allocation5 + $0x558] sm:$0xff]
    %v247 = vld [vmem:[#allocation5 + $0x560] sm:$0xff]
    %v248 = vld [vmem:[#allocation5 + $0x568] sm:$0xff]
    %v249 = vld [vmem:[#allocation5 + $0x570] sm:$0xff]
    %v250 = vld [vmem:[#allocation5 + $0x578] sm:$0xf]
    %v251 = vld [vmem:[#allocation5 + $0x57c] sm:$0xff]
    %v252 = vld [vmem:[#allocation5 + $0x584] sm:$0xff]
    %v253 = vld [vmem:[#allocation5 + $0x58c] sm:$0xff]
    %v254 = vld [vmem:[#allocation5 + $0x594] sm:$0xff]
    %v255 = vld [vmem:[#allocation5 + $0x59c] sm:$0xf]
    %v256 = vld [vmem:[#allocation5 + $0x5a0] sm:$0xff]
    %v257 = vld [vmem:[#allocation5 + $0x5a8] sm:$0xff]
    %v258 = vld [vmem:[#allocation5 + $0x5b0] sm:$0xff]
    %v259 = vld [vmem:[#allocation5 + $0x5b8] sm:$0xff]
    %v260 = vld [vmem:[#allocation5 + $0x5c0] sm:$0xf]
    %v261 = vld [vmem:[#allocation5 + $0x5c4] sm:$0xff]
    %v262 = vld [vmem:[#allocation5 + $0x5cc] sm:$0xff]
    %v263 = vld [vmem:[#allocation5 + $0x5d4] sm:$0xff]
    %v264 = vld [vmem:[#allocation5 + $0x5dc] sm:$0xff]
    %v265 = vld [vmem:[#allocation5 + $0x5e4] sm:$0xf]
    %v266 = vld [vmem:[#allocation5 + $0x5e8] sm:$0xff]
    %v267 = vld [vmem:[#allocation5 + $0x5f0] sm:$0xff]
    %v268 = vld [vmem:[#allocation5 + $0x5f8] sm:$0xff]
    %v269 = vld [vmem:[#allocation5 + $0x600] sm:$0xff]
    %v270 = vld [vmem:[#allocation5 + $0x608] sm:$0xf]
    %v271 = vld [vmem:[#allocation5 + $0x60c] sm:$0xff]
    %v272 = vld [vmem:[#allocation5 + $0x614] sm:$0xff]
    %v273 = vld [vmem:[#allocation5 + $0x61c] sm:$0xff]
    %v274 = vld [vmem:[#allocation5 + $0x624] sm:$0xff]
    %v275 = vld [vmem:[#allocation5 + $0x62c] sm:$0xf]
    %v276 = vld [vmem:[#allocation5 + $0x630] sm:$0xff]
    %v277 = vld [vmem:[#allocation5 + $0x638] sm:$0xff]
    %v278 = vld [vmem:[#allocation5 + $0x640] sm:$0xff]
    %v279 = vld [vmem:[#allocation5 + $0x648] sm:$0xff]
    %v280 = vld [vmem:[#allocation5 + $0x650] sm:$0xf]
    %v281 = vld [vmem:[#allocation5 + $0x654] sm:$0xff]
    %v282 = vld [vmem:[#allocation5 + $0x65c] sm:$0xff]
    %v283 = vld [vmem:[#allocation5 + $0x664] sm:$0xff]
    %v284 = vld [vmem:[#allocation5 + $0x66c] sm:$0xff]
    %v285 = vld [vmem:[#allocation5 + $0x674] sm:$0xf]
    %v286 = vld [vmem:[#allocation5 + $0x678] sm:$0xff]
    %v287 = vld [vmem:[#allocation5 + $0x680] sm:$0xff]
    %v288 = vld [vmem:[#allocation5 + $0x688] sm:$0xff]
    %v289 = vld [vmem:[#allocation5 + $0x690] sm:$0xff]
    %v290 = vld [vmem:[#allocation5 + $0x698] sm:$0xf]
    %v291 = vld [vmem:[#allocation5 + $0x69c] sm:$0xff]
    %v292 = vld [vmem:[#allocation5 + $0x6a4] sm:$0xff]
    %v293 = vld [vmem:[#allocation5 + $0x6ac] sm:$0xff]
    %v294 = vld [vmem:[#allocation5 + $0x6b4] sm:$0xff]
    %v295 = vld [vmem:[#allocation5 + $0x6bc] sm:$0xf]
    %v296 = vld [vmem:[#allocation5 + $0x6c0] sm:$0xff]
    %v297 = vld [vmem:[#allocation5 + $0x6c8] sm:$0xff]
    %v298 = vld [vmem:[#allocation5 + $0x6d0] sm:$0xff]
    %v299 = vld [vmem:[#allocation5 + $0x6d8] sm:$0xff]
    %v300 = vld [vmem:[#allocation5 + $0x6e0] sm:$0xf]
    %v301 = vld [vmem:[#allocation5 + $0x6e4] sm:$0xff]
    %v302 = vld [vmem:[#allocation5 + $0x6ec] sm:$0xff]
    %v303 = vld [vmem:[#allocation5 + $0x6f4] sm:$0xff]
    %v304 = vld [vmem:[#allocation5 + $0x6fc] sm:$0xff]
    %v305 = vld [vmem:[#allocation5 + $0x704] sm:$0xf]
    %v306 = vld [vmem:[#allocation5 + $0x708] sm:$0xff]
    %v307 = vld [vmem:[#allocation5 + $0x710] sm:$0xff]
    %v308 = vld [vmem:[#allocation5 + $0x718] sm:$0xff]
    %v309 = vld [vmem:[#allocation5 + $0x720] sm:$0xff]
    %v310 = vld [vmem:[#allocation5 + $0x728] sm:$0xf]
    %v311 = vld [vmem:[#allocation5 + $0x72c] sm:$0xff]
    %v312 = vld [vmem:[#allocation5 + $0x734] sm:$0xff]
    %v313 = vld [vmem:[#allocation5 + $0x73c] sm:$0xff]
    %v314 = vld [vmem:[#allocation5 + $0x744] sm:$0xff]
    %v315 = vld [vmem:[#allocation5 + $0x74c] sm:$0xf]
    %v316 = vld [vmem:[#allocation5 + $0x750] sm:$0xff]
    %v317 = vld [vmem:[#allocation5 + $0x758] sm:$0xff]
    %v318 = vld [vmem:[#allocation5 + $0x760] sm:$0xff]
    %v319 = vld [vmem:[#allocation5 + $0x768] sm:$0xff]
    %v320 = vld [vmem:[#allocation5 + $0x770] sm:$0xf]
    %v321 = vld [vmem:[#allocation5 + $0x774] sm:$0xff]
    %v322 = vld [vmem:[#allocation5 + $0x77c] sm:$0xff]
    %v323 = vld [vmem:[#allocation5 + $0x784] sm:$0xff]
    %v324 = vld [vmem:[#allocation5 + $0x78c] sm:$0xff]
    %v325 = vld [vmem:[#allocation5 + $0x794] sm:$0xf]
    %v326 = vld [vmem:[#allocation5 + $0x798] sm:$0xff]
    %v327 = vld [vmem:[#allocation5 + $0x7a0] sm:$0xff]
    %v328 = vld [vmem:[#allocation5 + $0x7a8] sm:$0xff]
    %v329 = vld [vmem:[#allocation5 + $0x7b0] sm:$0xff]
    %v330 = vld [vmem:[#allocation5 + $0x7b8] sm:$0xf]
    %v331 = vld [vmem:[#allocation5 + $0x7bc] sm:$0xff]
    %v332 = vld [vmem:[#allocation5 + $0x7c4] sm:$0xff]
    %v333 = vld [vmem:[#allocation5 + $0x7cc] sm:$0xff]
    %v334 = vld [vmem:[#allocation5 + $0x7d4] sm:$0xff]
    %v335 = vld [vmem:[#allocation5 + $0x7dc] sm:$0xf]
    %v336 = vld [vmem:[#allocation5 + $0x7e0] sm:$0xff]
    %v337 = vld [vmem:[#allocation5 + $0x7e8] sm:$0xff]
    %v338 = vld [vmem:[#allocation5 + $0x7f0] sm:$0xff]
    %v339 = vld [vmem:[#allocation5 + $0x7f8] sm:$0xff]
    %v340 = vld [vmem:[#allocation5 + $0x800] sm:$0xf]
    %v341 = vld [vmem:[#allocation5 + $0x804] sm:$0xff]
    %v342 = vld [vmem:[#allocation5 + $0x80c] sm:$0xff]
    %v343 = vld [vmem:[#allocation5 + $0x814] sm:$0xff]
    %v344 = vld [vmem:[#allocation5 + $0x81c] sm:$0xff]
    %v345 = vld [vmem:[#allocation5 + $0x824] sm:$0xf]
    %v346 = vld [vmem:[#allocation5 + $0x828] sm:$0xff]
    %v347 = vld [vmem:[#allocation5 + $0x830] sm:$0xff]
    %v348 = vld [vmem:[#allocation5 + $0x838] sm:$0xff]
    %v349 = vld [vmem:[#allocation5 + $0x840] sm:$0xff]
    %v350 = vld [vmem:[#allocation5 + $0x848] sm:$0xf]
    %v351 = vld [vmem:[#allocation5 + $0x84c] sm:$0xff]
    %v352 = vld [vmem:[#allocation5 + $0x854] sm:$0xff]
    %v353 = vld [vmem:[#allocation5 + $0x85c] sm:$0xff]
    %v354 = vld [vmem:[#allocation5 + $0x864] sm:$0xff]
    %v355 = vld [vmem:[#allocation5 + $0x86c] sm:$0xf]
    %v356 = vld [vmem:[#allocation5 + $0x870] sm:$0xff]
    %v357 = vld [vmem:[#allocation5 + $0x878] sm:$0xff]
    %v358 = vld [vmem:[#allocation5 + $0x880] sm:$0xff]
    %v359 = vld [vmem:[#allocation5 + $0x888] sm:$0xff]
    %v360 = vld [vmem:[#allocation5 + $0x890] sm:$0xf]
    %v361 = vld [vmem:[#allocation5 + $0x894] sm:$0xff]
    %v362 = vld [vmem:[#allocation5 + $0x89c] sm:$0xff]
    %v363 = vld [vmem:[#allocation5 + $0x8a4] sm:$0xff]
    %v364 = vld [vmem:[#allocation5 + $0x8ac] sm:$0xff]
    %v365 = vld [vmem:[#allocation5 + $0x8b4] sm:$0xf]
    %v366 = vld [vmem:[#allocation5 + $0x8b8] sm:$0xff]
    %v367 = vld [vmem:[#allocation5 + $0x8c0] sm:$0xff]
    %v368 = vld [vmem:[#allocation5 + $0x8c8] sm:$0xff]
    %v369 = vld [vmem:[#allocation5 + $0x8d0] sm:$0xff]
    %v370 = vld [vmem:[#allocation5 + $0x8d8] sm:$0xf]
    %v371 = vld [vmem:[#allocation5 + $0x8dc] sm:$0xff]
    %v372 = vld [vmem:[#allocation5 + $0x8e4] sm:$0xff]
    %v373 = vld [vmem:[#allocation5 + $0x8ec] sm:$0xff]
    %v374 = vld [vmem:[#allocation5 + $0x8f4] sm:$0xff]
    %v375 = vld [vmem:[#allocation5 + $0x8fc] sm:$0xf]
    %v376 = vld [vmem:[#allocation5 + $0x900] sm:$0xff]
    %v377 = vld [vmem:[#allocation5 + $0x908] sm:$0xff]
    %v378 = vld [vmem:[#allocation5 + $0x910] sm:$0xff]
    %v379 = vld [vmem:[#allocation5 + $0x918] sm:$0xff]
    %v380 = vld [vmem:[#allocation5 + $0x920] sm:$0xf]
    %v381 = vld [vmem:[#allocation5 + $0x924] sm:$0xff]
    %v382 = vld [vmem:[#allocation5 + $0x92c] sm:$0xff]
    %v383 = vld [vmem:[#allocation5 + $0x934] sm:$0xff]
    %v384 = vld [vmem:[#allocation5 + $0x93c] sm:$0xff]
    %v385 = vld [vmem:[#allocation5 + $0x944] sm:$0xf]
    %v386 = vld [vmem:[#allocation5 + $0x948] sm:$0xff]
    %v387 = vld [vmem:[#allocation5 + $0x950] sm:$0xff]
    %v388 = vld [vmem:[#allocation5 + $0x958] sm:$0xff]
    %v389 = vld [vmem:[#allocation5 + $0x960] sm:$0xff]
    %v390 = vld [vmem:[#allocation5 + $0x968] sm:$0xf]
    %v391 = vld [vmem:[#allocation5 + $0x96c] sm:$0xff]
    %v392 = vld [vmem:[#allocation5 + $0x974] sm:$0xff]
    %v393 = vld [vmem:[#allocation5 + $0x97c] sm:$0xff]
    %v394 = vld [vmem:[#allocation5 + $0x984] sm:$0xff]
    %v395 = vld [vmem:[#allocation5 + $0x98c] sm:$0xf]
    %v396 = vld [vmem:[#allocation5 + $0x990] sm:$0xff]
    %v397 = vld [vmem:[#allocation5 + $0x998] sm:$0xff]
    %v398 = vld [vmem:[#allocation5 + $0x9a0] sm:$0xff]
    %v399 = vld [vmem:[#allocation5 + $0x9a8] sm:$0xff]
    %v400 = vld [vmem:[#allocation5 + $0x9b0] sm:$0xf]
    %v401 = vld [vmem:[#allocation5 + $0x9b4] sm:$0xff]
    %v402 = vld [vmem:[#allocation5 + $0x9bc] sm:$0xff]
    %v403 = vld [vmem:[#allocation5 + $0x9c4] sm:$0xff]
    %v404 = vld [vmem:[#allocation5 + $0x9cc] sm:$0xff]
    %v405 = vld [vmem:[#allocation5 + $0x9d4] sm:$0xf]
    %v406 = vld [vmem:[#allocation5 + $0x9d8] sm:$0xff]
    %v407 = vld [vmem:[#allocation5 + $0x9e0] sm:$0xff]
    %v408 = vld [vmem:[#allocation5 + $0x9e8] sm:$0xff]
    %v409 = vld [vmem:[#allocation5 + $0x9f0] sm:$0xff]
    %v410 = vld [vmem:[#allocation5 + $0x9f8] sm:$0xf]
    %v411 = vld [vmem:[#allocation5 + $0x9fc] sm:$0xff]
    %v412 = vld [vmem:[#allocation5 + $0xa04] sm:$0xff]
    %v413 = vld [vmem:[#allocation5 + $0xa0c] sm:$0xff]
    %v414 = vld [vmem:[#allocation5 + $0xa14] sm:$0xff]
    %v415 = vld [vmem:[#allocation5 + $0xa1c] sm:$0xf]
    %v416 = vld [vmem:[#allocation5 + $0xa20] sm:$0xff]
    %v417 = vld [vmem:[#allocation5 + $0xa28] sm:$0xff]
    %v418 = vld [vmem:[#allocation5 + $0xa30] sm:$0xff]
    %v419 = vld [vmem:[#allocation5 + $0xa38] sm:$0xff]
    %v420 = vld [vmem:[#allocation5 + $0xa40] sm:$0xf]
    %v421 = vld [vmem:[#allocation5 + $0xa44] sm:$0x33]
    %v422 = vld [vmem:[#allocation5 + $0xa4c] sm:$0x33]
    %v423 = vld [vmem:[#allocation5 + $0xa54] sm:$0x33]
    %v424 = vld [vmem:[#allocation5 + $0xa5c] sm:$0x33]
    %v425 = vld [vmem:[#allocation5 + $0xa64] sm:$0x3]
    %v426 = vld [vmem:[#allocation7] sm:$0xff]
    %v427 = vld [vmem:[#allocation7 + $0x8] sm:$0x1]
    %v430 = vlaneseq
    %v431 = vshrl.u32 %v430, 7
    %v432 = vsub.s32 0, %v431
    %v433 = vrot.slane %v426, %v432
    %v434 = vlaneseq
    %v435 = vshrl.u32 %v434, 7
    %v436 = vsub.s32 1, %v435
    %v437 = vrot.slane %v426, %v436
    %v438 = vlaneseq
    %v439 = vshrl.u32 %v438, 7
    %v440 = vsub.s32 2, %v439
    %v441 = vrot.slane %v426, %v440
    %v442 = vlaneseq
    %v443 = vshrl.u32 %v442, 7
    %v444 = vsub.s32 3, %v443
    %v445 = vrot.slane %v426, %v444
    %v446 = vlaneseq
    %v447 = vshrl.u32 %v446, 7
    %v448 = vsub.s32 4, %v447
    %v449 = vrot.slane %v426, %v448
    %v450 = vlaneseq
    %v451 = vshrl.u32 %v450, 7
    %v452 = vsub.s32 5, %v451
    %v453 = vrot.slane %v426, %v452
    %v454 = vlaneseq
    %v455 = vshrl.u32 %v454, 7
    %v456 = vsub.s32 6, %v455
    %v457 = vrot.slane %v426, %v456
    %v458 = vlaneseq
    %v459 = vshrl.u32 %v458, 7
    %v460 = vsub.s32 7, %v459
    %v461 = vrot.slane %v426, %v460
    %v462 = vlaneseq
    %v463 = vshrl.u32 %v462, 7
    %v464 = vsub.s32 0, %v463
    %v465 = vrot.slane %v427, %v464
    %v478 = vunpack.c.l.b16 %v53
    %v479 = vunpack.c.h.b16 %v53
    %v480 = vunpack.c.l.b16 %v54
    %v481 = vunpack.c.h.b16 %v54
    %v482 = vunpack.c.l.b16 %v55
    %v483 = vpack.c.b16 %v478, %v478
    %v484 = vpack.c.b16 %v479, %v479
    %v485 = vpack.c.b16 %v480, %v480
    %v486 = vpack.c.b16 %v481, %v481
    %v487 = vpack.c.b16 %v482, %v482
    %v862 = vunpack.c.l.b16 %v56
    %v863 = vunpack.c.h.b16 %v56
    %v864 = vunpack.c.l.b16 %v57
    %v865 = vunpack.c.h.b16 %v57
    %v866 = vunpack.c.l.b16 %v58
    %v867 = vunpack.c.h.b16 %v58
    %v868 = vunpack.c.l.b16 %v59
    %v869 = vunpack.c.h.b16 %v59
    %v870 = vunpack.c.l.b16 %v60
    %v871 = vunpack.c.l.b16 %v61
    %v872 = vunpack.c.h.b16 %v61
    %v873 = vunpack.c.l.b16 %v62
    %v874 = vunpack.c.h.b16 %v62
    %v875 = vunpack.c.l.b16 %v63
    %v876 = vunpack.c.h.b16 %v63
    %v877 = vunpack.c.l.b16 %v64
    %v878 = vunpack.c.h.b16 %v64
    %v879 = vunpack.c.l.b16 %v65
    %v880 = vunpack.c.l.b16 %v66
    %v881 = vunpack.c.h.b16 %v66
    %v882 = vunpack.c.l.b16 %v67
    %v883 = vunpack.c.h.b16 %v67
    %v884 = vunpack.c.l.b16 %v68
    %v885 = vunpack.c.h.b16 %v68
    %v886 = vunpack.c.l.b16 %v69
    %v887 = vunpack.c.h.b16 %v69
    %v888 = vunpack.c.l.b16 %v70
    %v889 = vunpack.c.l.b16 %v71
    %v890 = vunpack.c.h.b16 %v71
    %v891 = vunpack.c.l.b16 %v72
    %v892 = vunpack.c.h.b16 %v72
    %v893 = vunpack.c.l.b16 %v73
    %v894 = vunpack.c.h.b16 %v73
    %v895 = vunpack.c.l.b16 %v74
    %v896 = vunpack.c.h.b16 %v74
    %v897 = vunpack.c.l.b16 %v75
    %v898 = vunpack.c.l.b16 %v76
    %v899 = vunpack.c.h.b16 %v76
    %v900 = vunpack.c.l.b16 %v77
    %v901 = vunpack.c.h.b16 %v77
    %v902 = vunpack.c.l.b16 %v78
    %v903 = vunpack.c.h.b16 %v78
    %v904 = vunpack.c.l.b16 %v79
    %v905 = vunpack.c.h.b16 %v79
    %v906 = vunpack.c.l.b16 %v80
    %v907 = vunpack.c.l.b16 %v81
    %v908 = vunpack.c.h.b16 %v81
    %v909 = vunpack.c.l.b16 %v82
    %v910 = vunpack.c.h.b16 %v82
    %v911 = vunpack.c.l.b16 %v83
    %v912 = vunpack.c.h.b16 %v83
    %v913 = vunpack.c.l.b16 %v84
    %v914 = vunpack.c.h.b16 %v84
    %v915 = vunpack.c.l.b16 %v85
    %v916 = vunpack.c.l.b16 %v86
    %v917 = vunpack.c.h.b16 %v86
    %v918 = vunpack.c.l.b16 %v87
    %v919 = vunpack.c.h.b16 %v87
    %v920 = vunpack.c.l.b16 %v88
    %v921 = vunpack.c.h.b16 %v88
    %v922 = vunpack.c.l.b16 %v89
    %v923 = vunpack.c.h.b16 %v89
    %v924 = vunpack.c.l.b16 %v90
    %v925 = vunpack.c.l.b16 %v91
    %v926 = vunpack.c.h.b16 %v91
    %v927 = vunpack.c.l.b16 %v92
    %v928 = vunpack.c.h.b16 %v92
    %v929 = vunpack.c.l.b16 %v93
    %v930 = vunpack.c.h.b16 %v93
    %v931 = vunpack.c.l.b16 %v94
    %v932 = vunpack.c.h.b16 %v94
    %v933 = vunpack.c.l.b16 %v95
    %v934 = vunpack.c.l.b16 %v96
    %v935 = vunpack.c.h.b16 %v96
    %v936 = vunpack.c.l.b16 %v97
    %v937 = vunpack.c.h.b16 %v97
    %v938 = vunpack.c.l.b16 %v98
    %v939 = vunpack.c.h.b16 %v98
    %v940 = vunpack.c.l.b16 %v99
    %v941 = vunpack.c.h.b16 %v99
    %v942 = vunpack.c.l.b16 %v100
    %v943 = vunpack.c.l.b16 %v101
    %v944 = vunpack.c.h.b16 %v101
    %v945 = vunpack.c.l.b16 %v102
    %v946 = vunpack.c.h.b16 %v102
    %v947 = vunpack.c.l.b16 %v103
    %v948 = vunpack.c.h.b16 %v103
    %v949 = vunpack.c.l.b16 %v104
    %v950 = vunpack.c.h.b16 %v104
    %v951 = vunpack.c.l.b16 %v105
    %v952 = vunpack.c.l.b16 %v106
    %v953 = vunpack.c.h.b16 %v106
    %v954 = vunpack.c.l.b16 %v107
    %v955 = vunpack.c.h.b16 %v107
    %v956 = vunpack.c.l.b16 %v108
    %v957 = vunpack.c.h.b16 %v108
    %v958 = vunpack.c.l.b16 %v109
    %v959 = vunpack.c.h.b16 %v109
    %v960 = vunpack.c.l.b16 %v110
    %v961 = vunpack.c.l.b16 %v111
    %v962 = vunpack.c.h.b16 %v111
    %v963 = vunpack.c.l.b16 %v112
    %v964 = vunpack.c.h.b16 %v112
    %v965 = vunpack.c.l.b16 %v113
    %v966 = vunpack.c.h.b16 %v113
    %v967 = vunpack.c.l.b16 %v114
    %v968 = vunpack.c.h.b16 %v114
    %v969 = vunpack.c.l.b16 %v115
    %v970 = vunpack.c.l.b16 %v116
    %v971 = vunpack.c.h.b16 %v116
    %v972 = vunpack.c.l.b16 %v117
    %v973 = vunpack.c.h.b16 %v117
    %v974 = vunpack.c.l.b16 %v118
    %v975 = vunpack.c.h.b16 %v118
    %v976 = vunpack.c.l.b16 %v119
    %v977 = vunpack.c.h.b16 %v119
    %v978 = vunpack.c.l.b16 %v120
    %v979 = vunpack.c.l.b16 %v121
    %v980 = vunpack.c.h.b16 %v121
    %v981 = vunpack.c.l.b16 %v122
    %v982 = vunpack.c.h.b16 %v122
    %v983 = vunpack.c.l.b16 %v123
    %v984 = vunpack.c.h.b16 %v123
    %v985 = vunpack.c.l.b16 %v124
    %v986 = vunpack.c.h.b16 %v124
    %v987 = vunpack.c.l.b16 %v125
    %v988 = vunpack.c.l.b16 %v126
    %v989 = vunpack.c.h.b16 %v126
    %v990 = vunpack.c.l.b16 %v127
    %v991 = vunpack.c.h.b16 %v127
    %v992 = vunpack.c.l.b16 %v128
    %v993 = vunpack.c.h.b16 %v128
    %v994 = vunpack.c.l.b16 %v129
    %v995 = vunpack.c.h.b16 %v129
    %v996 = vunpack.c.l.b16 %v130
    %v997 = vunpack.c.l.b16 %v131
    %v998 = vunpack.c.h.b16 %v131
    %v999 = vunpack.c.l.b16 %v132
    %v1000 = vunpack.c.h.b16 %v132
    %v1001 = vunpack.c.l.b16 %v133
    %v1002 = vunpack.c.h.b16 %v133
    %v1003 = vunpack.c.l.b16 %v134
    %v1004 = vunpack.c.h.b16 %v134
    %v1005 = vunpack.c.l.b16 %v135
    %v1006 = vunpack.c.l.b16 %v136
    %v1007 = vunpack.c.h.b16 %v136
    %v1008 = vunpack.c.l.b16 %v137
    %v1009 = vunpack.c.h.b16 %v137
    %v1010 = vunpack.c.l.b16 %v138
    %v1011 = vunpack.c.h.b16 %v138
    %v1012 = vunpack.c.l.b16 %v139
    %v1013 = vunpack.c.h.b16 %v139
    %v1014 = vunpack.c.l.b16 %v140
    %v1015 = vunpack.c.l.b16 %v141
    %v1016 = vunpack.c.h.b16 %v141
    %v1017 = vunpack.c.l.b16 %v142
    %v1018 = vunpack.c.h.b16 %v142
    %v1019 = vunpack.c.l.b16 %v143
    %v1020 = vunpack.c.h.b16 %v143
    %v1021 = vunpack.c.l.b16 %v144
    %v1022 = vunpack.c.h.b16 %v144
    %v1023 = vunpack.c.l.b16 %v145
    %v1024 = vunpack.c.l.b16 %v146
    %v1025 = vunpack.c.h.b16 %v146
    %v1026 = vunpack.c.l.b16 %v147
    %v1027 = vunpack.c.h.b16 %v147
    %v1028 = vunpack.c.l.b16 %v148
    %v1029 = vunpack.c.h.b16 %v148
    %v1030 = vunpack.c.l.b16 %v149
    %v1031 = vunpack.c.h.b16 %v149
    %v1032 = vunpack.c.l.b16 %v150
    %v1033 = vunpack.c.l.b16 %v151
    %v1034 = vunpack.c.h.b16 %v151
    %v1035 = vunpack.c.l.b16 %v152
    %v1036 = vunpack.c.h.b16 %v152
    %v1037 = vunpack.c.l.b16 %v153
    %v1038 = vunpack.c.h.b16 %v153
    %v1039 = vunpack.c.l.b16 %v154
    %v1040 = vunpack.c.h.b16 %v154
    %v1041 = vunpack.c.l.b16 %v155
    %v1042 = vunpack.c.l.b16 %v156
    %v1043 = vunpack.c.h.b16 %v156
    %v1044 = vunpack.c.l.b16 %v157
    %v1045 = vunpack.c.h.b16 %v157
    %v1046 = vunpack.c.l.b16 %v158
    %v1047 = vunpack.c.h.b16 %v158
    %v1048 = vunpack.c.l.b16 %v159
    %v1049 = vunpack.c.h.b16 %v159
    %v1050 = vunpack.c.l.b16 %v160
    %v1051 = vunpack.c.l.b16 %v161
    %v1052 = vunpack.c.h.b16 %v161
    %v1053 = vunpack.c.l.b16 %v162
    %v1054 = vunpack.c.h.b16 %v162
    %v1055 = vunpack.c.l.b16 %v163
    %v1056 = vunpack.c.h.b16 %v163
    %v1057 = vunpack.c.l.b16 %v164
    %v1058 = vunpack.c.h.b16 %v164
    %v1059 = vunpack.c.l.b16 %v165
    %v1060 = vunpack.c.l.b16 %v166
    %v1061 = vunpack.c.h.b16 %v166
    %v1062 = vunpack.c.l.b16 %v167
    %v1063 = vunpack.c.h.b16 %v167
    %v1064 = vunpack.c.l.b16 %v168
    %v1065 = vunpack.c.h.b16 %v168
    %v1066 = vunpack.c.l.b16 %v169
    %v1067 = vunpack.c.h.b16 %v169
    %v1068 = vunpack.c.l.b16 %v170
    %v1069 = vunpack.c.l.b16 %v171
    %v1070 = vunpack.c.h.b16 %v171
    %v1071 = vunpack.c.l.b16 %v172
    %v1072 = vunpack.c.h.b16 %v172
    %v1073 = vunpack.c.l.b16 %v173
    %v1074 = vunpack.c.h.b16 %v173
    %v1075 = vunpack.c.l.b16 %v174
    %v1076 = vunpack.c.h.b16 %v174
    %v1077 = vunpack.c.l.b16 %v175
    %v1078 = vunpack.c.l.b16 %v176
    %v1079 = vunpack.c.h.b16 %v176
    %v1080 = vunpack.c.l.b16 %v177
    %v1081 = vunpack.c.h.b16 %v177
    %v1082 = vunpack.c.l.b16 %v178
    %v1083 = vunpack.c.h.b16 %v178
    %v1084 = vunpack.c.l.b16 %v179
    %v1085 = vunpack.c.h.b16 %v179
    %v1086 = vunpack.c.l.b16 %v180
    %v1087 = vunpack.c.l.b16 %v181
    %v1088 = vunpack.c.h.b16 %v181
    %v1089 = vunpack.c.l.b16 %v182
    %v1090 = vunpack.c.h.b16 %v182
    %v1091 = vunpack.c.l.b16 %v183
    %v1092 = vunpack.c.h.b16 %v183
    %v1093 = vunpack.c.l.b16 %v184
    %v1094 = vunpack.c.h.b16 %v184
    %v1095 = vunpack.c.l.b16 %v185
    %v1096 = vunpack.c.l.b16 %v186
    %v1097 = vunpack.c.h.b16 %v186
    %v1098 = vunpack.c.l.b16 %v187
    %v1099 = vunpack.c.h.b16 %v187
    %v1100 = vunpack.c.l.b16 %v188
    %v1101 = vunpack.c.h.b16 %v188
    %v1102 = vunpack.c.l.b16 %v189
    %v1103 = vunpack.c.h.b16 %v189
    %v1104 = vunpack.c.l.b16 %v190
    %v1105 = vunpack.c.l.b16 %v191
    %v1106 = vunpack.c.h.b16 %v191
    %v1107 = vunpack.c.l.b16 %v192
    %v1108 = vunpack.c.h.b16 %v192
    %v1109 = vunpack.c.l.b16 %v193
    %v1110 = vunpack.c.h.b16 %v193
    %v1111 = vunpack.c.l.b16 %v194
    %v1112 = vunpack.c.h.b16 %v194
    %v1113 = vunpack.c.l.b16 %v195
    %v1114 = vunpack.c.l.b16 %v196
    %v1115 = vunpack.c.h.b16 %v196
    %v1116 = vunpack.c.l.b16 %v197
    %v1117 = vunpack.c.h.b16 %v197
    %v1118 = vunpack.c.l.b16 %v198
    %v1119 = vunpack.c.h.b16 %v198
    %v1120 = vunpack.c.l.b16 %v199
    %v1121 = vunpack.c.h.b16 %v199
    %v1122 = vunpack.c.l.b16 %v200
    %v1123 = vunpack.c.l.b16 %v201
    %v1124 = vunpack.c.h.b16 %v201
    %v1125 = vunpack.c.l.b16 %v202
    %v1126 = vunpack.c.h.b16 %v202
    %v1127 = vunpack.c.l.b16 %v203
    %v1128 = vunpack.c.h.b16 %v203
    %v1129 = vunpack.c.l.b16 %v204
    %v1130 = vunpack.c.h.b16 %v204
    %v1131 = vunpack.c.l.b16 %v205
    %v1132 = vunpack.c.l.b16 %v206
    %v1133 = vunpack.c.h.b16 %v206
    %v1134 = vunpack.c.l.b16 %v207
    %v1135 = vunpack.c.h.b16 %v207
    %v1136 = vunpack.c.l.b16 %v208
    %v1137 = vunpack.c.h.b16 %v208
    %v1138 = vunpack.c.l.b16 %v209
    %v1139 = vunpack.c.h.b16 %v209
    %v1140 = vunpack.c.l.b16 %v210
    %v1141 = vunpack.c.l.b16 %v211
    %v1142 = vunpack.c.h.b16 %v211
    %v1143 = vunpack.c.l.b16 %v212
    %v1144 = vunpack.c.h.b16 %v212
    %v1145 = vunpack.c.l.b16 %v213
    %v1146 = vunpack.c.h.b16 %v213
    %v1147 = vunpack.c.l.b16 %v214
    %v1148 = vunpack.c.h.b16 %v214
    %v1149 = vunpack.c.l.b16 %v215
    %v1150 = vunpack.c.l.b16 %v216
    %v1151 = vunpack.c.h.b16 %v216
    %v1152 = vunpack.c.l.b16 %v217
    %v1153 = vunpack.c.h.b16 %v217
    %v1154 = vunpack.c.l.b16 %v218
    %v1155 = vunpack.c.h.b16 %v218
    %v1156 = vunpack.c.l.b16 %v219
    %v1157 = vunpack.c.h.b16 %v219
    %v1158 = vunpack.c.l.b16 %v220
    %v1159 = vunpack.c.l.b16 %v221
    %v1160 = vunpack.c.h.b16 %v221
    %v1161 = vunpack.c.l.b16 %v222
    %v1162 = vunpack.c.h.b16 %v222
    %v1163 = vunpack.c.l.b16 %v223
    %v1164 = vunpack.c.h.b16 %v223
    %v1165 = vunpack.c.l.b16 %v224
    %v1166 = vunpack.c.h.b16 %v224
    %v1167 = vunpack.c.l.b16 %v225
    %v1168 = vunpack.c.l.b16 %v226
    %v1169 = vunpack.c.h.b16 %v226
    %v1170 = vunpack.c.l.b16 %v227
    %v1171 = vunpack.c.h.b16 %v227
    %v1172 = vunpack.c.l.b16 %v228
    %v1173 = vunpack.c.h.b16 %v228
    %v1174 = vunpack.c.l.b16 %v229
    %v1175 = vunpack.c.h.b16 %v229
    %v1176 = vunpack.c.l.b16 %v230
    %v1177 = vunpack.c.l.b16 %v231
    %v1178 = vunpack.c.h.b16 %v231
    %v1179 = vunpack.c.l.b16 %v232
    %v1180 = vunpack.c.h.b16 %v232
    %v1181 = vunpack.c.l.b16 %v233
    %v1182 = vunpack.c.h.b16 %v233
    %v1183 = vunpack.c.l.b16 %v234
    %v1184 = vunpack.c.h.b16 %v234
    %v1185 = vunpack.c.l.b16 %v235
    %v1186 = vunpack.c.l.b16 %v236
    %v1187 = vunpack.c.h.b16 %v236
    %v1188 = vunpack.c.l.b16 %v237
    %v1189 = vunpack.c.h.b16 %v237
    %v1190 = vunpack.c.l.b16 %v238
    %v1191 = vunpack.c.h.b16 %v238
    %v1192 = vunpack.c.l.b16 %v239
    %v1193 = vunpack.c.h.b16 %v239
    %v1194 = vunpack.c.l.b16 %v240
    %v1195 = vunpack.c.l.b16 %v241
    %v1196 = vunpack.c.h.b16 %v241
    %v1197 = vunpack.c.l.b16 %v242
    %v1198 = vunpack.c.h.b16 %v242
    %v1199 = vunpack.c.l.b16 %v243
    %v1200 = vunpack.c.h.b16 %v243
    %v1201 = vunpack.c.l.b16 %v244
    %v1202 = vunpack.c.h.b16 %v244
    %v1203 = vunpack.c.l.b16 %v245
    %v1204 = vunpack.c.l.b16 %v246
    %v1205 = vunpack.c.h.b16 %v246
    %v1206 = vunpack.c.l.b16 %v247
    %v1207 = vunpack.c.h.b16 %v247
    %v1208 = vunpack.c.l.b16 %v248
    %v1209 = vunpack.c.h.b16 %v248
    %v1210 = vunpack.c.l.b16 %v249
    %v1211 = vunpack.c.h.b16 %v249
    %v1212 = vunpack.c.l.b16 %v250
    %v1213 = vunpack.c.l.b16 %v251
    %v1214 = vunpack.c.h.b16 %v251
    %v1215 = vunpack.c.l.b16 %v252
    %v1216 = vunpack.c.h.b16 %v252
    %v1217 = vunpack.c.l.b16 %v253
    %v1218 = vunpack.c.h.b16 %v253
    %v1219 = vunpack.c.l.b16 %v254
    %v1220 = vunpack.c.h.b16 %v254
    %v1221 = vunpack.c.l.b16 %v255
    %v1222 = vunpack.c.l.b16 %v256
    %v1223 = vunpack.c.h.b16 %v256
    %v1224 = vunpack.c.l.b16 %v257
    %v1225 = vunpack.c.h.b16 %v257
    %v1226 = vunpack.c.l.b16 %v258
    %v1227 = vunpack.c.h.b16 %v258
    %v1228 = vunpack.c.l.b16 %v259
    %v1229 = vunpack.c.h.b16 %v259
    %v1230 = vunpack.c.l.b16 %v260
    %v1231 = vunpack.c.l.b16 %v261
    %v1232 = vunpack.c.h.b16 %v261
    %v1233 = vunpack.c.l.b16 %v262
    %v1234 = vunpack.c.h.b16 %v262
    %v1235 = vunpack.c.l.b16 %v263
    %v1236 = vunpack.c.h.b16 %v263
    %v1237 = vunpack.c.l.b16 %v264
    %v1238 = vunpack.c.h.b16 %v264
    %v1239 = vunpack.c.l.b16 %v265
    %v1240 = vunpack.c.l.b16 %v266
    %v1241 = vunpack.c.h.b16 %v266
    %v1242 = vunpack.c.l.b16 %v267
    %v1243 = vunpack.c.h.b16 %v267
    %v1244 = vunpack.c.l.b16 %v268
    %v1245 = vunpack.c.h.b16 %v268
    %v1246 = vunpack.c.l.b16 %v269
    %v1247 = vunpack.c.h.b16 %v269
    %v1248 = vunpack.c.l.b16 %v270
    %v1249 = vunpack.c.l.b16 %v271
    %v1250 = vunpack.c.h.b16 %v271
    %v1251 = vunpack.c.l.b16 %v272
    %v1252 = vunpack.c.h.b16 %v272
    %v1253 = vunpack.c.l.b16 %v273
    %v1254 = vunpack.c.h.b16 %v273
    %v1255 = vunpack.c.l.b16 %v274
    %v1256 = vunpack.c.h.b16 %v274
    %v1257 = vunpack.c.l.b16 %v275
    %v1258 = vunpack.c.l.b16 %v276
    %v1259 = vunpack.c.h.b16 %v276
    %v1260 = vunpack.c.l.b16 %v277
    %v1261 = vunpack.c.h.b16 %v277
    %v1262 = vunpack.c.l.b16 %v278
    %v1263 = vunpack.c.h.b16 %v278
    %v1264 = vunpack.c.l.b16 %v279
    %v1265 = vunpack.c.h.b16 %v279
    %v1266 = vunpack.c.l.b16 %v280
    %v1267 = vunpack.c.l.b16 %v281
    %v1268 = vunpack.c.h.b16 %v281
    %v1269 = vunpack.c.l.b16 %v282
    %v1270 = vunpack.c.h.b16 %v282
    %v1271 = vunpack.c.l.b16 %v283
    %v1272 = vunpack.c.h.b16 %v283
    %v1273 = vunpack.c.l.b16 %v284
    %v1274 = vunpack.c.h.b16 %v284
    %v1275 = vunpack.c.l.b16 %v285
    %v1276 = vunpack.c.l.b16 %v286
    %v1277 = vunpack.c.h.b16 %v286
    %v1278 = vunpack.c.l.b16 %v287
    %v1279 = vunpack.c.h.b16 %v287
    %v1280 = vunpack.c.l.b16 %v288
    %v1281 = vunpack.c.h.b16 %v288
    %v1282 = vunpack.c.l.b16 %v289
    %v1283 = vunpack.c.h.b16 %v289
    %v1284 = vunpack.c.l.b16 %v290
    %v1285 = vunpack.c.l.b16 %v291
    %v1286 = vunpack.c.h.b16 %v291
    %v1287 = vunpack.c.l.b16 %v292
    %v1288 = vunpack.c.h.b16 %v292
    %v1289 = vunpack.c.l.b16 %v293
    %v1290 = vunpack.c.h.b16 %v293
    %v1291 = vunpack.c.l.b16 %v294
    %v1292 = vunpack.c.h.b16 %v294
    %v1293 = vunpack.c.l.b16 %v295
    %v1294 = vunpack.c.l.b16 %v296
    %v1295 = vunpack.c.h.b16 %v296
    %v1296 = vunpack.c.l.b16 %v297
    %v1297 = vunpack.c.h.b16 %v297
    %v1298 = vunpack.c.l.b16 %v298
    %v1299 = vunpack.c.h.b16 %v298
    %v1300 = vunpack.c.l.b16 %v299
    %v1301 = vunpack.c.h.b16 %v299
    %v1302 = vunpack.c.l.b16 %v300
    %v1303 = vunpack.c.l.b16 %v301
    %v1304 = vunpack.c.h.b16 %v301
    %v1305 = vunpack.c.l.b16 %v302
    %v1306 = vunpack.c.h.b16 %v302
    %v1307 = vunpack.c.l.b16 %v303
    %v1308 = vunpack.c.h.b16 %v303
    %v1309 = vunpack.c.l.b16 %v304
    %v1310 = vunpack.c.h.b16 %v304
    %v1311 = vunpack.c.l.b16 %v305
    %v1312 = vunpack.c.l.b16 %v306
    %v1313 = vunpack.c.h.b16 %v306
    %v1314 = vunpack.c.l.b16 %v307
    %v1315 = vunpack.c.h.b16 %v307
    %v1316 = vunpack.c.l.b16 %v308
    %v1317 = vunpack.c.h.b16 %v308
    %v1318 = vunpack.c.l.b16 %v309
    %v1319 = vunpack.c.h.b16 %v309
    %v1320 = vunpack.c.l.b16 %v310
    %v1321 = vunpack.c.l.b16 %v311
    %v1322 = vunpack.c.h.b16 %v311
    %v1323 = vunpack.c.l.b16 %v312
    %v1324 = vunpack.c.h.b16 %v312
    %v1325 = vunpack.c.l.b16 %v313
    %v1326 = vunpack.c.h.b16 %v313
    %v1327 = vunpack.c.l.b16 %v314
    %v1328 = vunpack.c.h.b16 %v314
    %v1329 = vunpack.c.l.b16 %v315
    %v1330 = vunpack.c.l.b16 %v316
    %v1331 = vunpack.c.h.b16 %v316
    %v1332 = vunpack.c.l.b16 %v317
    %v1333 = vunpack.c.h.b16 %v317
    %v1334 = vunpack.c.l.b16 %v318
    %v1335 = vunpack.c.h.b16 %v318
    %v1336 = vunpack.c.l.b16 %v319
    %v1337 = vunpack.c.h.b16 %v319
    %v1338 = vunpack.c.l.b16 %v320
    %v1339 = vunpack.c.l.b16 %v321
    %v1340 = vunpack.c.h.b16 %v321
    %v1341 = vunpack.c.l.b16 %v322
    %v1342 = vunpack.c.h.b16 %v322
    %v1343 = vunpack.c.l.b16 %v323
    %v1344 = vunpack.c.h.b16 %v323
    %v1345 = vunpack.c.l.b16 %v324
    %v1346 = vunpack.c.h.b16 %v324
    %v1347 = vunpack.c.l.b16 %v325
    %v1348 = vunpack.c.l.b16 %v326
    %v1349 = vunpack.c.h.b16 %v326
    %v1350 = vunpack.c.l.b16 %v327
    %v1351 = vunpack.c.h.b16 %v327
    %v1352 = vunpack.c.l.b16 %v328
    %v1353 = vunpack.c.h.b16 %v328
    %v1354 = vunpack.c.l.b16 %v329
    %v1355 = vunpack.c.h.b16 %v329
    %v1356 = vunpack.c.l.b16 %v330
    %v1357 = vunpack.c.l.b16 %v331
    %v1358 = vunpack.c.h.b16 %v331
    %v1359 = vunpack.c.l.b16 %v332
    %v1360 = vunpack.c.h.b16 %v332
    %v1361 = vunpack.c.l.b16 %v333
    %v1362 = vunpack.c.h.b16 %v333
    %v1363 = vunpack.c.l.b16 %v334
    %v1364 = vunpack.c.h.b16 %v334
    %v1365 = vunpack.c.l.b16 %v335
    %v1366 = vunpack.c.l.b16 %v336
    %v1367 = vunpack.c.h.b16 %v336
    %v1368 = vunpack.c.l.b16 %v337
    %v1369 = vunpack.c.h.b16 %v337
    %v1370 = vunpack.c.l.b16 %v338
    %v1371 = vunpack.c.h.b16 %v338
    %v1372 = vunpack.c.l.b16 %v339
    %v1373 = vunpack.c.h.b16 %v339
    %v1374 = vunpack.c.l.b16 %v340
    %v1375 = vunpack.c.l.b16 %v341
    %v1376 = vunpack.c.h.b16 %v341
    %v1377 = vunpack.c.l.b16 %v342
    %v1378 = vunpack.c.h.b16 %v342
    %v1379 = vunpack.c.l.b16 %v343
    %v1380 = vunpack.c.h.b16 %v343
    %v1381 = vunpack.c.l.b16 %v344
    %v1382 = vunpack.c.h.b16 %v344
    %v1383 = vunpack.c.l.b16 %v345
    %v1384 = vunpack.c.l.b16 %v346
    %v1385 = vunpack.c.h.b16 %v346
    %v1386 = vunpack.c.l.b16 %v347
    %v1387 = vunpack.c.h.b16 %v347
    %v1388 = vunpack.c.l.b16 %v348
    %v1389 = vunpack.c.h.b16 %v348
    %v1390 = vunpack.c.l.b16 %v349
    %v1391 = vunpack.c.h.b16 %v349
    %v1392 = vunpack.c.l.b16 %v350
    %v1393 = vunpack.c.l.b16 %v351
    %v1394 = vunpack.c.h.b16 %v351
    %v1395 = vunpack.c.l.b16 %v352
    %v1396 = vunpack.c.h.b16 %v352
    %v1397 = vunpack.c.l.b16 %v353
    %v1398 = vunpack.c.h.b16 %v353
    %v1399 = vunpack.c.l.b16 %v354
    %v1400 = vunpack.c.h.b16 %v354
    %v1401 = vunpack.c.l.b16 %v355
    %v1402 = vunpack.c.l.b16 %v356
    %v1403 = vunpack.c.h.b16 %v356
    %v1404 = vunpack.c.l.b16 %v357
    %v1405 = vunpack.c.h.b16 %v357
    %v1406 = vunpack.c.l.b16 %v358
    %v1407 = vunpack.c.h.b16 %v358
    %v1408 = vunpack.c.l.b16 %v359
    %v1409 = vunpack.c.h.b16 %v359
    %v1410 = vunpack.c.l.b16 %v360
    %v1411 = vunpack.c.l.b16 %v361
    %v1412 = vunpack.c.h.b16 %v361
    %v1413 = vunpack.c.l.b16 %v362
    %v1414 = vunpack.c.h.b16 %v362
    %v1415 = vunpack.c.l.b16 %v363
    %v1416 = vunpack.c.h.b16 %v363
    %v1417 = vunpack.c.l.b16 %v364
    %v1418 = vunpack.c.h.b16 %v364
    %v1419 = vunpack.c.l.b16 %v365
    %v1420 = vunpack.c.l.b16 %v366
    %v1421 = vunpack.c.h.b16 %v366
    %v1422 = vunpack.c.l.b16 %v367
    %v1423 = vunpack.c.h.b16 %v367
    %v1424 = vunpack.c.l.b16 %v368
    %v1425 = vunpack.c.h.b16 %v368
    %v1426 = vunpack.c.l.b16 %v369
    %v1427 = vunpack.c.h.b16 %v369
    %v1428 = vunpack.c.l.b16 %v370
    %v1429 = vunpack.c.l.b16 %v371
    %v1430 = vunpack.c.h.b16 %v371
    %v1431 = vunpack.c.l.b16 %v372
    %v1432 = vunpack.c.h.b16 %v372
    %v1433 = vunpack.c.l.b16 %v373
    %v1434 = vunpack.c.h.b16 %v373
    %v1435 = vunpack.c.l.b16 %v374
    %v1436 = vunpack.c.h.b16 %v374
    %v1437 = vunpack.c.l.b16 %v375
    %v1438 = vunpack.c.l.b16 %v376
    %v1439 = vunpack.c.h.b16 %v376
    %v1440 = vunpack.c.l.b16 %v377
    %v1441 = vunpack.c.h.b16 %v377
    %v1442 = vunpack.c.l.b16 %v378
    %v1443 = vunpack.c.h.b16 %v378
    %v1444 = vunpack.c.l.b16 %v379
    %v1445 = vunpack.c.h.b16 %v379
    %v1446 = vunpack.c.l.b16 %v380
    %v1447 = vunpack.c.l.b16 %v381
    %v1448 = vunpack.c.h.b16 %v381
    %v1449 = vunpack.c.l.b16 %v382
    %v1450 = vunpack.c.h.b16 %v382
    %v1451 = vunpack.c.l.b16 %v383
    %v1452 = vunpack.c.h.b16 %v383
    %v1453 = vunpack.c.l.b16 %v384
    %v1454 = vunpack.c.h.b16 %v384
    %v1455 = vunpack.c.l.b16 %v385
    %v1456 = vunpack.c.l.b16 %v386
    %v1457 = vunpack.c.h.b16 %v386
    %v1458 = vunpack.c.l.b16 %v387
    %v1459 = vunpack.c.h.b16 %v387
    %v1460 = vunpack.c.l.b16 %v388
    %v1461 = vunpack.c.h.b16 %v388
    %v1462 = vunpack.c.l.b16 %v389
    %v1463 = vunpack.c.h.b16 %v389
    %v1464 = vunpack.c.l.b16 %v390
    %v1465 = vunpack.c.l.b16 %v391
    %v1466 = vunpack.c.h.b16 %v391
    %v1467 = vunpack.c.l.b16 %v392
    %v1468 = vunpack.c.h.b16 %v392
    %v1469 = vunpack.c.l.b16 %v393
    %v1470 = vunpack.c.h.b16 %v393
    %v1471 = vunpack.c.l.b16 %v394
    %v1472 = vunpack.c.h.b16 %v394
    %v1473 = vunpack.c.l.b16 %v395
    %v1474 = vunpack.c.l.b16 %v396
    %v1475 = vunpack.c.h.b16 %v396
    %v1476 = vunpack.c.l.b16 %v397
    %v1477 = vunpack.c.h.b16 %v397
    %v1478 = vunpack.c.l.b16 %v398
    %v1479 = vunpack.c.h.b16 %v398
    %v1480 = vunpack.c.l.b16 %v399
    %v1481 = vunpack.c.h.b16 %v399
    %v1482 = vunpack.c.l.b16 %v400
    %v1483 = vunpack.c.l.b16 %v401
    %v1484 = vunpack.c.h.b16 %v401
    %v1485 = vunpack.c.l.b16 %v402
    %v1486 = vunpack.c.h.b16 %v402
    %v1487 = vunpack.c.l.b16 %v403
    %v1488 = vunpack.c.h.b16 %v403
    %v1489 = vunpack.c.l.b16 %v404
    %v1490 = vunpack.c.h.b16 %v404
    %v1491 = vunpack.c.l.b16 %v405
    %v1492 = vunpack.c.l.b16 %v406
    %v1493 = vunpack.c.h.b16 %v406
    %v1494 = vunpack.c.l.b16 %v407
    %v1495 = vunpack.c.h.b16 %v407
    %v1496 = vunpack.c.l.b16 %v408
    %v1497 = vunpack.c.h.b16 %v408
    %v1498 = vunpack.c.l.b16 %v409
    %v1499 = vunpack.c.h.b16 %v409
    %v1500 = vunpack.c.l.b16 %v410
    %v1501 = vunpack.c.l.b16 %v411
    %v1502 = vunpack.c.h.b16 %v411
    %v1503 = vunpack.c.l.b16 %v412
    %v1504 = vunpack.c.h.b16 %v412
    %v1505 = vunpack.c.l.b16 %v413
    %v1506 = vunpack.c.h.b16 %v413
    %v1507 = vunpack.c.l.b16 %v414
    %v1508 = vunpack.c.h.b16 %v414
    %v1509 = vunpack.c.l.b16 %v415
    %v1510 = vunpack.c.l.b16 %v416
    %v1511 = vunpack.c.h.b16 %v416
    %v1512 = vunpack.c.l.b16 %v417
    %v1513 = vunpack.c.h.b16 %v417
    %v1514 = vunpack.c.l.b16 %v418
    %v1515 = vunpack.c.h.b16 %v418
    %v1516 = vunpack.c.l.b16 %v419
    %v1517 = vunpack.c.h.b16 %v419
    %v1518 = vunpack.c.l.b16 %v420
    %v1519 = vunpack.c.l.b16 %v421
    %v1520 = vunpack.c.h.b16 %v421
    %v1521 = vunpack.c.l.b16 %v422
    %v1522 = vunpack.c.h.b16 %v422
    %v1523 = vunpack.c.l.b16 %v423
    %v1524 = vunpack.c.h.b16 %v423
    %v1525 = vunpack.c.l.b16 %v424
    %v1526 = vunpack.c.h.b16 %v424
    %v1527 = vunpack.c.l.b16 %v425
    %v1528 = vpack.c.b16 %v871, %v862
    %v1529 = vpack.c.b16 %v872, %v863
    %v1530 = vpack.c.b16 %v873, %v864
    %v1531 = vpack.c.b16 %v874, %v865
    %v1532 = vpack.c.b16 %v875, %v866
    %v1533 = vpack.c.b16 %v876, %v867
    %v1534 = vpack.c.b16 %v877, %v868
    %v1535 = vpack.c.b16 %v878, %v869
    %v1536 = vpack.c.b16 %v879, %v870
    %v1537 = vpack.c.b16 %v889, %v880
    %v1538 = vpack.c.b16 %v890, %v881
    %v1539 = vpack.c.b16 %v891, %v882
    %v1540 = vpack.c.b16 %v892, %v883
    %v1541 = vpack.c.b16 %v893, %v884
    %v1542 = vpack.c.b16 %v894, %v885
    %v1543 = vpack.c.b16 %v895, %v886
    %v1544 = vpack.c.b16 %v896, %v887
    %v1545 = vpack.c.b16 %v897, %v888
    %v1546 = vpack.c.b16 %v907, %v898
    %v1547 = vpack.c.b16 %v908, %v899
    %v1548 = vpack.c.b16 %v909, %v900
    %v1549 = vpack.c.b16 %v910, %v901
    %v1550 = vpack.c.b16 %v911, %v902
    %v1551 = vpack.c.b16 %v912, %v903
    %v1552 = vpack.c.b16 %v913, %v904
    %v1553 = vpack.c.b16 %v914, %v905
    %v1554 = vpack.c.b16 %v915, %v906
    %v1555 = vpack.c.b16 %v925, %v916
    %v1556 = vpack.c.b16 %v926, %v917
    %v1557 = vpack.c.b16 %v927, %v918
    %v1558 = vpack.c.b16 %v928, %v919
    %v1559 = vpack.c.b16 %v929, %v920
    %v1560 = vpack.c.b16 %v930, %v921
    %v1561 = vpack.c.b16 %v931, %v922
    %v1562 = vpack.c.b16 %v932, %v923
    %v1563 = vpack.c.b16 %v933, %v924
    %v1564 = vpack.c.b16 %v943, %v934
    %v1565 = vpack.c.b16 %v944, %v935
    %v1566 = vpack.c.b16 %v945, %v936
    %v1567 = vpack.c.b16 %v946, %v937
    %v1568 = vpack.c.b16 %v947, %v938
    %v1569 = vpack.c.b16 %v948, %v939
    %v1570 = vpack.c.b16 %v949, %v940
    %v1571 = vpack.c.b16 %v950, %v941
    %v1572 = vpack.c.b16 %v951, %v942
    %v1573 = vpack.c.b16 %v961, %v952
    %v1574 = vpack.c.b16 %v962, %v953
    %v1575 = vpack.c.b16 %v963, %v954
    %v1576 = vpack.c.b16 %v964, %v955
    %v1577 = vpack.c.b16 %v965, %v956
    %v1578 = vpack.c.b16 %v966, %v957
    %v1579 = vpack.c.b16 %v967, %v958
    %v1580 = vpack.c.b16 %v968, %v959
    %v1581 = vpack.c.b16 %v969, %v960
    %v1582 = vpack.c.b16 %v979, %v970
    %v1583 = vpack.c.b16 %v980, %v971
    %v1584 = vpack.c.b16 %v981, %v972
    %v1585 = vpack.c.b16 %v982, %v973
    %v1586 = vpack.c.b16 %v983, %v974
    %v1587 = vpack.c.b16 %v984, %v975
    %v1588 = vpack.c.b16 %v985, %v976
    %v1589 = vpack.c.b16 %v986, %v977
    %v1590 = vpack.c.b16 %v987, %v978
    %v1591 = vpack.c.b16 %v997, %v988
    %v1592 = vpack.c.b16 %v998, %v989
    %v1593 = vpack.c.b16 %v999, %v990
    %v1594 = vpack.c.b16 %v1000, %v991
    %v1595 = vpack.c.b16 %v1001, %v992
    %v1596 = vpack.c.b16 %v1002, %v993
    %v1597 = vpack.c.b16 %v1003, %v994
    %v1598 = vpack.c.b16 %v1004, %v995
    %v1599 = vpack.c.b16 %v1005, %v996
    %v1600 = vpack.c.b16 %v1015, %v1006
    %v1601 = vpack.c.b16 %v1016, %v1007
    %v1602 = vpack.c.b16 %v1017, %v1008
    %v1603 = vpack.c.b16 %v1018, %v1009
    %v1604 = vpack.c.b16 %v1019, %v1010
    %v1605 = vpack.c.b16 %v1020, %v1011
    %v1606 = vpack.c.b16 %v1021, %v1012
    %v1607 = vpack.c.b16 %v1022, %v1013
    %v1608 = vpack.c.b16 %v1023, %v1014
    %v1609 = vpack.c.b16 %v1033, %v1024
    %v1610 = vpack.c.b16 %v1034, %v1025
    %v1611 = vpack.c.b16 %v1035, %v1026
    %v1612 = vpack.c.b16 %v1036, %v1027
    %v1613 = vpack.c.b16 %v1037, %v1028
    %v1614 = vpack.c.b16 %v1038, %v1029
    %v1615 = vpack.c.b16 %v1039, %v1030
    %v1616 = vpack.c.b16 %v1040, %v1031
    %v1617 = vpack.c.b16 %v1041, %v1032
    %v1618 = vpack.c.b16 %v1051, %v1042
    %v1619 = vpack.c.b16 %v1052, %v1043
    %v1620 = vpack.c.b16 %v1053, %v1044
    %v1621 = vpack.c.b16 %v1054, %v1045
    %v1622 = vpack.c.b16 %v1055, %v1046
    %v1623 = vpack.c.b16 %v1056, %v1047
    %v1624 = vpack.c.b16 %v1057, %v1048
    %v1625 = vpack.c.b16 %v1058, %v1049
    %v1626 = vpack.c.b16 %v1059, %v1050
    %v1627 = vpack.c.b16 %v1069, %v1060
    %v1628 = vpack.c.b16 %v1070, %v1061
    %v1629 = vpack.c.b16 %v1071, %v1062
    %v1630 = vpack.c.b16 %v1072, %v1063
    %v1631 = vpack.c.b16 %v1073, %v1064
    %v1632 = vpack.c.b16 %v1074, %v1065
    %v1633 = vpack.c.b16 %v1075, %v1066
    %v1634 = vpack.c.b16 %v1076, %v1067
    %v1635 = vpack.c.b16 %v1077, %v1068
    %v1636 = vpack.c.b16 %v1087, %v1078
    %v1637 = vpack.c.b16 %v1088, %v1079
    %v1638 = vpack.c.b16 %v1089, %v1080
    %v1639 = vpack.c.b16 %v1090, %v1081
    %v1640 = vpack.c.b16 %v1091, %v1082
    %v1641 = vpack.c.b16 %v1092, %v1083
    %v1642 = vpack.c.b16 %v1093, %v1084
    %v1643 = vpack.c.b16 %v1094, %v1085
    %v1644 = vpack.c.b16 %v1095, %v1086
    %v1645 = vpack.c.b16 %v1105, %v1096
    %v1646 = vpack.c.b16 %v1106, %v1097
    %v1647 = vpack.c.b16 %v1107, %v1098
    %v1648 = vpack.c.b16 %v1108, %v1099
    %v1649 = vpack.c.b16 %v1109, %v1100
    %v1650 = vpack.c.b16 %v1110, %v1101
    %v1651 = vpack.c.b16 %v1111, %v1102
    %v1652 = vpack.c.b16 %v1112, %v1103
    %v1653 = vpack.c.b16 %v1113, %v1104
    %v1654 = vpack.c.b16 %v1123, %v1114
    %v1655 = vpack.c.b16 %v1124, %v1115
    %v1656 = vpack.c.b16 %v1125, %v1116
    %v1657 = vpack.c.b16 %v1126, %v1117
    %v1658 = vpack.c.b16 %v1127, %v1118
    %v1659 = vpack.c.b16 %v1128, %v1119
    %v1660 = vpack.c.b16 %v1129, %v1120
    %v1661 = vpack.c.b16 %v1130, %v1121
    %v1662 = vpack.c.b16 %v1131, %v1122
    %v1663 = vpack.c.b16 %v1141, %v1132
    %v1664 = vpack.c.b16 %v1142, %v1133
    %v1665 = vpack.c.b16 %v1143, %v1134
    %v1666 = vpack.c.b16 %v1144, %v1135
    %v1667 = vpack.c.b16 %v1145, %v1136
    %v1668 = vpack.c.b16 %v1146, %v1137
    %v1669 = vpack.c.b16 %v1147, %v1138
    %v1670 = vpack.c.b16 %v1148, %v1139
    %v1671 = vpack.c.b16 %v1149, %v1140
    %v1672 = vpack.c.b16 %v1159, %v1150
    %v1673 = vpack.c.b16 %v1160, %v1151
    %v1674 = vpack.c.b16 %v1161, %v1152
    %v1675 = vpack.c.b16 %v1162, %v1153
    %v1676 = vpack.c.b16 %v1163, %v1154
    %v1677 = vpack.c.b16 %v1164, %v1155
    %v1678 = vpack.c.b16 %v1165, %v1156
    %v1679 = vpack.c.b16 %v1166, %v1157
    %v1680 = vpack.c.b16 %v1167, %v1158
    %v1681 = vpack.c.b16 %v1177, %v1168
    %v1682 = vpack.c.b16 %v1178, %v1169
    %v1683 = vpack.c.b16 %v1179, %v1170
    %v1684 = vpack.c.b16 %v1180, %v1171
    %v1685 = vpack.c.b16 %v1181, %v1172
    %v1686 = vpack.c.b16 %v1182, %v1173
    %v1687 = vpack.c.b16 %v1183, %v1174
    %v1688 = vpack.c.b16 %v1184, %v1175
    %v1689 = vpack.c.b16 %v1185, %v1176
    %v1690 = vpack.c.b16 %v1195, %v1186
    %v1691 = vpack.c.b16 %v1196, %v1187
    %v1692 = vpack.c.b16 %v1197, %v1188
    %v1693 = vpack.c.b16 %v1198, %v1189
    %v1694 = vpack.c.b16 %v1199, %v1190
    %v1695 = vpack.c.b16 %v1200, %v1191
    %v1696 = vpack.c.b16 %v1201, %v1192
    %v1697 = vpack.c.b16 %v1202, %v1193
    %v1698 = vpack.c.b16 %v1203, %v1194
    %v1699 = vpack.c.b16 %v1213, %v1204
    %v1700 = vpack.c.b16 %v1214, %v1205
    %v1701 = vpack.c.b16 %v1215, %v1206
    %v1702 = vpack.c.b16 %v1216, %v1207
    %v1703 = vpack.c.b16 %v1217, %v1208
    %v1704 = vpack.c.b16 %v1218, %v1209
    %v1705 = vpack.c.b16 %v1219, %v1210
    %v1706 = vpack.c.b16 %v1220, %v1211
    %v1707 = vpack.c.b16 %v1221, %v1212
    %v1708 = vpack.c.b16 %v1231, %v1222
    %v1709 = vpack.c.b16 %v1232, %v1223
    %v1710 = vpack.c.b16 %v1233, %v1224
    %v1711 = vpack.c.b16 %v1234, %v1225
    %v1712 = vpack.c.b16 %v1235, %v1226
    %v1713 = vpack.c.b16 %v1236, %v1227
    %v1714 = vpack.c.b16 %v1237, %v1228
    %v1715 = vpack.c.b16 %v1238, %v1229
    %v1716 = vpack.c.b16 %v1239, %v1230
    %v1717 = vpack.c.b16 %v1249, %v1240
    %v1718 = vpack.c.b16 %v1250, %v1241
    %v1719 = vpack.c.b16 %v1251, %v1242
    %v1720 = vpack.c.b16 %v1252, %v1243
    %v1721 = vpack.c.b16 %v1253, %v1244
    %v1722 = vpack.c.b16 %v1254, %v1245
    %v1723 = vpack.c.b16 %v1255, %v1246
    %v1724 = vpack.c.b16 %v1256, %v1247
    %v1725 = vpack.c.b16 %v1257, %v1248
    %v1726 = vpack.c.b16 %v1267, %v1258
    %v1727 = vpack.c.b16 %v1268, %v1259
    %v1728 = vpack.c.b16 %v1269, %v1260
    %v1729 = vpack.c.b16 %v1270, %v1261
    %v1730 = vpack.c.b16 %v1271, %v1262
    %v1731 = vpack.c.b16 %v1272, %v1263
    %v1732 = vpack.c.b16 %v1273, %v1264
    %v1733 = vpack.c.b16 %v1274, %v1265
    %v1734 = vpack.c.b16 %v1275, %v1266
    %v1735 = vpack.c.b16 %v1285, %v1276
    %v1736 = vpack.c.b16 %v1286, %v1277
    %v1737 = vpack.c.b16 %v1287, %v1278
    %v1738 = vpack.c.b16 %v1288, %v1279
    %v1739 = vpack.c.b16 %v1289, %v1280
    %v1740 = vpack.c.b16 %v1290, %v1281
    %v1741 = vpack.c.b16 %v1291, %v1282
    %v1742 = vpack.c.b16 %v1292, %v1283
    %v1743 = vpack.c.b16 %v1293, %v1284
    %v1744 = vpack.c.b16 %v1303, %v1294
    %v1745 = vpack.c.b16 %v1304, %v1295
    %v1746 = vpack.c.b16 %v1305, %v1296
    %v1747 = vpack.c.b16 %v1306, %v1297
    %v1748 = vpack.c.b16 %v1307, %v1298
    %v1749 = vpack.c.b16 %v1308, %v1299
    %v1750 = vpack.c.b16 %v1309, %v1300
    %v1751 = vpack.c.b16 %v1310, %v1301
    %v1752 = vpack.c.b16 %v1311, %v1302
    %v1753 = vpack.c.b16 %v1321, %v1312
    %v1754 = vpack.c.b16 %v1322, %v1313
    %v1755 = vpack.c.b16 %v1323, %v1314
    %v1756 = vpack.c.b16 %v1324, %v1315
    %v1757 = vpack.c.b16 %v1325, %v1316
    %v1758 = vpack.c.b16 %v1326, %v1317
    %v1759 = vpack.c.b16 %v1327, %v1318
    %v1760 = vpack.c.b16 %v1328, %v1319
    %v1761 = vpack.c.b16 %v1329, %v1320
    %v1762 = vpack.c.b16 %v1339, %v1330
    %v1763 = vpack.c.b16 %v1340, %v1331
    %v1764 = vpack.c.b16 %v1341, %v1332
    %v1765 = vpack.c.b16 %v1342, %v1333
    %v1766 = vpack.c.b16 %v1343, %v1334
    %v1767 = vpack.c.b16 %v1344, %v1335
    %v1768 = vpack.c.b16 %v1345, %v1336
    %v1769 = vpack.c.b16 %v1346, %v1337
    %v1770 = vpack.c.b16 %v1347, %v1338
    %v1771 = vpack.c.b16 %v1357, %v1348
    %v1772 = vpack.c.b16 %v1358, %v1349
    %v1773 = vpack.c.b16 %v1359, %v1350
    %v1774 = vpack.c.b16 %v1360, %v1351
    %v1775 = vpack.c.b16 %v1361, %v1352
    %v1776 = vpack.c.b16 %v1362, %v1353
    %v1777 = vpack.c.b16 %v1363, %v1354
    %v1778 = vpack.c.b16 %v1364, %v1355
    %v1779 = vpack.c.b16 %v1365, %v1356
    %v1780 = vpack.c.b16 %v1375, %v1366
    %v1781 = vpack.c.b16 %v1376, %v1367
    %v1782 = vpack.c.b16 %v1377, %v1368
    %v1783 = vpack.c.b16 %v1378, %v1369
    %v1784 = vpack.c.b16 %v1379, %v1370
    %v1785 = vpack.c.b16 %v1380, %v1371
    %v1786 = vpack.c.b16 %v1381, %v1372
    %v1787 = vpack.c.b16 %v1382, %v1373
    %v1788 = vpack.c.b16 %v1383, %v1374
    %v1789 = vpack.c.b16 %v1393, %v1384
    %v1790 = vpack.c.b16 %v1394, %v1385
    %v1791 = vpack.c.b16 %v1395, %v1386
    %v1792 = vpack.c.b16 %v1396, %v1387
    %v1793 = vpack.c.b16 %v1397, %v1388
    %v1794 = vpack.c.b16 %v1398, %v1389
    %v1795 = vpack.c.b16 %v1399, %v1390
    %v1796 = vpack.c.b16 %v1400, %v1391
    %v1797 = vpack.c.b16 %v1401, %v1392
    %v1798 = vpack.c.b16 %v1411, %v1402
    %v1799 = vpack.c.b16 %v1412, %v1403
    %v1800 = vpack.c.b16 %v1413, %v1404
    %v1801 = vpack.c.b16 %v1414, %v1405
    %v1802 = vpack.c.b16 %v1415, %v1406
    %v1803 = vpack.c.b16 %v1416, %v1407
    %v1804 = vpack.c.b16 %v1417, %v1408
    %v1805 = vpack.c.b16 %v1418, %v1409
    %v1806 = vpack.c.b16 %v1419, %v1410
    %v1807 = vpack.c.b16 %v1429, %v1420
    %v1808 = vpack.c.b16 %v1430, %v1421
    %v1809 = vpack.c.b16 %v1431, %v1422
    %v1810 = vpack.c.b16 %v1432, %v1423
    %v1811 = vpack.c.b16 %v1433, %v1424
    %v1812 = vpack.c.b16 %v1434, %v1425
    %v1813 = vpack.c.b16 %v1435, %v1426
    %v1814 = vpack.c.b16 %v1436, %v1427
    %v1815 = vpack.c.b16 %v1437, %v1428
    %v1816 = vpack.c.b16 %v1447, %v1438
    %v1817 = vpack.c.b16 %v1448, %v1439
    %v1818 = vpack.c.b16 %v1449, %v1440
    %v1819 = vpack.c.b16 %v1450, %v1441
    %v1820 = vpack.c.b16 %v1451, %v1442
    %v1821 = vpack.c.b16 %v1452, %v1443
    %v1822 = vpack.c.b16 %v1453, %v1444
    %v1823 = vpack.c.b16 %v1454, %v1445
    %v1824 = vpack.c.b16 %v1455, %v1446
    %v1825 = vpack.c.b16 %v1465, %v1456
    %v1826 = vpack.c.b16 %v1466, %v1457
    %v1827 = vpack.c.b16 %v1467, %v1458
    %v1828 = vpack.c.b16 %v1468, %v1459
    %v1829 = vpack.c.b16 %v1469, %v1460
    %v1830 = vpack.c.b16 %v1470, %v1461
    %v1831 = vpack.c.b16 %v1471, %v1462
    %v1832 = vpack.c.b16 %v1472, %v1463
    %v1833 = vpack.c.b16 %v1473, %v1464
    %v1834 = vpack.c.b16 %v1483, %v1474
    %v1835 = vpack.c.b16 %v1484, %v1475
    %v1836 = vpack.c.b16 %v1485, %v1476
    %v1837 = vpack.c.b16 %v1486, %v1477
    %v1838 = vpack.c.b16 %v1487, %v1478
    %v1839 = vpack.c.b16 %v1488, %v1479
    %v1840 = vpack.c.b16 %v1489, %v1480
    %v1841 = vpack.c.b16 %v1490, %v1481
    %v1842 = vpack.c.b16 %v1491, %v1482
    %v1843 = vpack.c.b16 %v1501, %v1492
    %v1844 = vpack.c.b16 %v1502, %v1493
    %v1845 = vpack.c.b16 %v1503, %v1494
    %v1846 = vpack.c.b16 %v1504, %v1495
    %v1847 = vpack.c.b16 %v1505, %v1496
    %v1848 = vpack.c.b16 %v1506, %v1497
    %v1849 = vpack.c.b16 %v1507, %v1498
    %v1850 = vpack.c.b16 %v1508, %v1499
    %v1851 = vpack.c.b16 %v1509, %v1500
    %v1852 = vpack.c.b16 %v1519, %v1510
    %v1853 = vpack.c.b16 %v1520, %v1511
    %v1854 = vpack.c.b16 %v1521, %v1512
    %v1855 = vpack.c.b16 %v1522, %v1513
    %v1856 = vpack.c.b16 %v1523, %v1514
    %v1857 = vpack.c.b16 %v1524, %v1515
    %v1858 = vpack.c.b16 %v1525, %v1516
    %v1859 = vpack.c.b16 %v1526, %v1517
    %v1860 = vpack.c.b16 %v1527, %v1518
    %vm2185 = vcmask 621568
    %v2187 = vsel %vm2185, %v487, 0
    %vm2189 = vcmask 1045504
    %v2191 = vsel %vm2189, %v1852, 0
    %v2194 = vsel %vm2189, %v1853, 0
    %v2197 = vsel %vm2189, %v1854, 0
    %v2200 = vsel %vm2189, %v1855, 0
    %v2203 = vsel %vm2189, %v1856, 0
    %v2206 = vsel %vm2189, %v1857, 0
    %v2209 = vsel %vm2189, %v1858, 0
    %v2212 = vsel %vm2189, %v1859, 0
    %v2215 = vsel %vm2189, %v1860, 0
    %2217 = vmatprep.subr.bf16.mxu0 %v1529
    %2218 = vmatpush1.bf16.msra.mxu0 %v1528
    %2219 = vmatprep.subr.bf16.mxu0 %v1538
    %2220 = vmatpush1.bf16.msra.mxu0 %v1537
    %2221 = vmatprep.subr.bf16.mxu0 %v1547
    %2222 = vmatpush1.bf16.msra.mxu0 %v1546
    %2223 = vmatprep.subr.bf16.mxu0 %v1556
    %2224 = vmatpush1.bf16.msra.mxu0 %v1555
    %2225 = vmatprep.subr.bf16.mxu0 %v1565
    %2226 = vmatpush1.bf16.msra.mxu0 %v1564
    %2227 = vmatprep.subr.bf16.mxu0 %v1574
    %2228 = vmatpush1.bf16.msra.mxu0 %v1573
    %2229 = vmatprep.subr.bf16.mxu0 %v1583
    %2230 = vmatpush1.bf16.msra.mxu0 %v1582
    %2231 = vmatprep.subr.bf16.mxu0 %v1592
    %2232 = vmatpush1.bf16.msra.mxu0 %v1591
    %2233 = vmatprep.subr.bf16.mxu0 %v1601
    %2234 = vmatpush1.bf16.msra.mxu0 %v1600
    %2235 = vmatprep.subr.bf16.mxu0 %v1610
    %2236 = vmatpush1.bf16.msra.mxu0 %v1609
    %2237 = vmatprep.subr.bf16.mxu0 %v1619
    %2238 = vmatpush1.bf16.msra.mxu0 %v1618
    %2239 = vmatprep.subr.bf16.mxu0 %v1628
    %2240 = vmatpush1.bf16.msra.mxu0 %v1627
    %2241 = vmatprep.subr.bf16.mxu0 %v1637
    %2242 = vmatpush1.bf16.msra.mxu0 %v1636
    %2243 = vmatprep.subr.bf16.mxu0 %v1646
    %2244 = vmatpush1.bf16.msra.mxu0 %v1645
    %2245 = vmatprep.subr.bf16.mxu0 %v1655
    %2246 = vmatpush1.bf16.msra.mxu0 %v1654
    %2247 = vmatprep.subr.bf16.mxu0 %v1664
    %2248 = vmatpush1.bf16.msra.mxu0 %v1663
    %2249 = vmatprep.mubr.bf16.mxu0 %v484
    %2250 = vmatmul.mubr.bf16.gmra.mrb[0].mxu0 %v483
    %v2251 = vpop.f32.mrb[0].mxu0
    %v2252 = vadd.f32 %v433, %v2251
    %v2253 = vpop.f32.mrb[0].mxu0
    %v2254 = vadd.f32 %v437, %v2253
    %v2255 = vpop.f32.mrb[0].mxu0
    %v2256 = vpop.f32.mrb[0].mxu0
    %2257 = vdwg.mxu0
    %2258 = vmatprep.subr.bf16.mxu0 %v1673
    %2259 = vmatpush1.bf16.msra.mxu0 %v1672
    %2260 = vmatprep.subr.bf16.mxu0 %v1682
    %2261 = vmatpush1.bf16.msra.mxu0 %v1681
    %2262 = vmatprep.subr.bf16.mxu0 %v1691
    %2263 = vmatpush1.bf16.msra.mxu0 %v1690
    %2264 = vmatprep.subr.bf16.mxu0 %v1700
    %2265 = vmatpush1.bf16.msra.mxu0 %v1699
    %2266 = vmatprep.subr.bf16.mxu0 %v1709
    %2267 = vmatpush1.bf16.msra.mxu0 %v1708
    %2268 = vmatprep.subr.bf16.mxu0 %v1718
    %2269 = vmatpush1.bf16.msra.mxu0 %v1717
    %2270 = vmatprep.subr.bf16.mxu0 %v1727
    %2271 = vmatpush1.bf16.msra.mxu0 %v1726
    %2272 = vmatprep.subr.bf16.mxu0 %v1736
    %2273 = vmatpush1.bf16.msra.mxu0 %v1735
    %2274 = vmatprep.subr.bf16.mxu0 %v1745
    %2275 = vmatpush1.bf16.msra.mxu0 %v1744
    %2276 = vmatprep.subr.bf16.mxu0 %v1754
    %2277 = vmatpush1.bf16.msra.mxu0 %v1753
    %2278 = vmatprep.subr.bf16.mxu0 %v1763
    %2279 = vmatpush1.bf16.msra.mxu0 %v1762
    %2280 = vmatprep.subr.bf16.mxu0 %v1772
    %2281 = vmatpush1.bf16.msra.mxu0 %v1771
    %2282 = vmatprep.subr.bf16.mxu0 %v1781
    %2283 = vmatpush1.bf16.msra.mxu0 %v1780
    %2284 = vmatprep.subr.bf16.mxu0 %v1790
    %2285 = vmatpush1.bf16.msra.mxu0 %v1789
    %2286 = vmatprep.subr.bf16.mxu0 %v1799
    %2287 = vmatpush1.bf16.msra.mxu0 %v1798
    %2288 = vmatprep.subr.bf16.mxu0 %v1808
    %2289 = vmatpush1.bf16.msra.mxu0 %v1807
    %2290 = vmatprep.mubr.bf16.mxu0 %v486
    %2291 = vmatmul.mubr.bf16.gmra.mrb[0].mxu0 %v485
    %v2292 = vpop.f32.mrb[0].mxu0
    %v2293 = vadd.f32 %v2252, %v2292
    %v2294 = vpop.f32.mrb[0].mxu0
    %v2295 = vadd.f32 %v2254, %v2294
    %v2296 = vpop.f32.mrb[0].mxu0
    %v2297 = vpop.f32.mrb[0].mxu0
    %2298 = vdwg.mxu0
    %2299 = vmatprep.subr.bf16.mxu0 %v1817
    %2300 = vmatpush1.bf16.msra.mxu0 %v1816
    %2301 = vmatprep.subr.bf16.mxu0 %v1826
    %2302 = vmatpush1.bf16.msra.mxu0 %v1825
    %2303 = vmatprep.subr.bf16.mxu0 %v1835
    %2304 = vmatpush1.bf16.msra.mxu0 %v1834
    %2305 = vmatprep.subr.bf16.mxu0 %v1844
    %2306 = vmatpush1.bf16.msra.mxu0 %v1843
    %2307 = vmatprep.subr.bf16.mxu0 %v2194
    %2308 = vmatpush1.bf16.msra.mxu0 %v2191
    %2309 = vmatprep.subr.bf16.mxu0 0
    %2310 = vmatpush1.bf16.msra.mxu0 0
    %2311 = vmatprep.subr.bf16.mxu0 0
    %2312 = vmatpush1.bf16.msra.mxu0 0
    %2313 = vmatprep.subr.bf16.mxu0 0
    %2314 = vmatpush1.bf16.msra.mxu0 0
    %2315 = vmatprep.subr.bf16.mxu0 0
    %2316 = vmatpush1.bf16.msra.mxu0 0
    %2317 = vmatprep.subr.bf16.mxu0 0
    %2318 = vmatpush1.bf16.msra.mxu0 0
    %2319 = vmatprep.subr.bf16.mxu0 0
    %2320 = vmatpush1.bf16.msra.mxu0 0
    %2321 = vmatprep.subr.bf16.mxu0 0
    %2322 = vmatpush1.bf16.msra.mxu0 0
    %2323 = vmatprep.subr.bf16.mxu0 0
    %2324 = vmatpush1.bf16.msra.mxu0 0
    %2325 = vmatprep.subr.bf16.mxu0 0
    %2326 = vmatpush1.bf16.msra.mxu0 0
    %2327 = vmatprep.subr.bf16.mxu0 0
    %2328 = vmatpush1.bf16.msra.mxu0 0
    %2329 = vmatprep.subr.bf16.mxu0 0
    %2330 = vmatpush1.bf16.msra.mxu0 0
    %2331 = vmatprep.mubr.bf16.mxu0 0
    %2332 = vmatmul.mubr.bf16.gmra.mrb[0].mxu0 %v2187
    %v2333 = vpop.f32.mrb[0].mxu0
    %v2334 = vadd.f32 %v2293, %v2333
    %v2335 = vpop.f32.mrb[0].mxu0
    %v2336 = vadd.f32 %v2295, %v2335
    %v2337 = vpop.f32.mrb[0].mxu0
    %v2338 = vpop.f32.mrb[0].mxu0
    %2339 = vdwg.mxu0
    %2340 = vmatprep.subr.bf16.mxu0 %v1531
    %2341 = vmatpush1.bf16.msra.mxu0 %v1530
    %2342 = vmatprep.subr.bf16.mxu0 %v1540
    %2343 = vmatpush1.bf16.msra.mxu0 %v1539
    %2344 = vmatprep.subr.bf16.mxu0 %v1549
    %2345 = vmatpush1.bf16.msra.mxu0 %v1548
    %2346 = vmatprep.subr.bf16.mxu0 %v1558
    %2347 = vmatpush1.bf16.msra.mxu0 %v1557
    %2348 = vmatprep.subr.bf16.mxu0 %v1567
    %2349 = vmatpush1.bf16.msra.mxu0 %v1566
    %2350 = vmatprep.subr.bf16.mxu0 %v1576
    %2351 = vmatpush1.bf16.msra.mxu0 %v1575
    %2352 = vmatprep.subr.bf16.mxu0 %v1585
    %2353 = vmatpush1.bf16.msra.mxu0 %v1584
    %2354 = vmatprep.subr.bf16.mxu0 %v1594
    %2355 = vmatpush1.bf16.msra.mxu0 %v1593
    %2356 = vmatprep.subr.bf16.mxu0 %v1603
    %2357 = vmatpush1.bf16.msra.mxu0 %v1602
    %2358 = vmatprep.subr.bf16.mxu0 %v1612
    %2359 = vmatpush1.bf16.msra.mxu0 %v1611
    %2360 = vmatprep.subr.bf16.mxu0 %v1621
    %2361 = vmatpush1.bf16.msra.mxu0 %v1620
    %2362 = vmatprep.subr.bf16.mxu0 %v1630
    %2363 = vmatpush1.bf16.msra.mxu0 %v1629
    %2364 = vmatprep.subr.bf16.mxu0 %v1639
    %2365 = vmatpush1.bf16.msra.mxu0 %v1638
    %2366 = vmatprep.subr.bf16.mxu0 %v1648
    %2367 = vmatpush1.bf16.msra.mxu0 %v1647
    %2368 = vmatprep.subr.bf16.mxu0 %v1657
    %2369 = vmatpush1.bf16.msra.mxu0 %v1656
    %2370 = vmatprep.subr.bf16.mxu0 %v1666
    %2371 = vmatpush1.bf16.msra.mxu0 %v1665
    %2372 = vmatprep.mubr.bf16.mxu0 %v484
    %2373 = vmatmul.mubr.bf16.gmra.mrb[0].mxu0 %v483
    %v2374 = vpop.f32.mrb[0].mxu0
    %v2375 = vadd.f32 %v441, %v2374
    %v2376 = vpop.f32.mrb[0].mxu0
    %v2377 = vadd.f32 %v445, %v2376
    %v2378 = vpop.f32.mrb[0].mxu0
    %v2379 = vpop.f32.mrb[0].mxu0
    %2380 = vdwg.mxu0
    %2381 = vmatprep.subr.bf16.mxu0 %v1675
    %2382 = vmatpush1.bf16.msra.mxu0 %v1674
    %2383 = vmatprep.subr.bf16.mxu0 %v1684
    %2384 = vmatpush1.bf16.msra.mxu0 %v1683
    %2385 = vmatprep.subr.bf16.mxu0 %v1693
    %2386 = vmatpush1.bf16.msra.mxu0 %v1692
    %2387 = vmatprep.subr.bf16.mxu0 %v1702
    %2388 = vmatpush1.bf16.msra.mxu0 %v1701
    %2389 = vmatprep.subr.bf16.mxu0 %v1711
    %2390 = vmatpush1.bf16.msra.mxu0 %v1710
    %2391 = vmatprep.subr.bf16.mxu0 %v1720
    %2392 = vmatpush1.bf16.msra.mxu0 %v1719
    %2393 = vmatprep.subr.bf16.mxu0 %v1729
    %2394 = vmatpush1.bf16.msra.mxu0 %v1728
    %2395 = vmatprep.subr.bf16.mxu0 %v1738
    %2396 = vmatpush1.bf16.msra.mxu0 %v1737
    %2397 = vmatprep.subr.bf16.mxu0 %v1747
    %2398 = vmatpush1.bf16.msra.mxu0 %v1746
    %2399 = vmatprep.subr.bf16.mxu0 %v1756
    %2400 = vmatpush1.bf16.msra.mxu0 %v1755
    %2401 = vmatprep.subr.bf16.mxu0 %v1765
    %2402 = vmatpush1.bf16.msra.mxu0 %v1764
    %2403 = vmatprep.subr.bf16.mxu0 %v1774
    %2404 = vmatpush1.bf16.msra.mxu0 %v1773
    %2405 = vmatprep.subr.bf16.mxu0 %v1783
    %2406 = vmatpush1.bf16.msra.mxu0 %v1782
    %2407 = vmatprep.subr.bf16.mxu0 %v1792
    %2408 = vmatpush1.bf16.msra.mxu0 %v1791
    %2409 = vmatprep.subr.bf16.mxu0 %v1801
    %2410 = vmatpush1.bf16.msra.mxu0 %v1800
    %2411 = vmatprep.subr.bf16.mxu0 %v1810
    %2412 = vmatpush1.bf16.msra.mxu0 %v1809
    %2413 = vmatprep.mubr.bf16.mxu0 %v486
    %2414 = vmatmul.mubr.bf16.gmra.mrb[0].mxu0 %v485
    %v2415 = vpop.f32.mrb[0].mxu0
    %v2416 = vadd.f32 %v2375, %v2415
    %v2417 = vpop.f32.mrb[0].mxu0
    %v2418 = vadd.f32 %v2377, %v2417
    %v2419 = vpop.f32.mrb[0].mxu0
    %v2420 = vpop.f32.mrb[0].mxu0
    %2421 = vdwg.mxu0
    %2422 = vmatprep.subr.bf16.mxu0 %v1819
    %2423 = vmatpush1.bf16.msra.mxu0 %v1818
    %2424 = vmatprep.subr.bf16.mxu0 %v1828
    %2425 = vmatpush1.bf16.msra.mxu0 %v1827
    %2426 = vmatprep.subr.bf16.mxu0 %v1837
    %2427 = vmatpush1.bf16.msra.mxu0 %v1836
    %2428 = vmatprep.subr.bf16.mxu0 %v1846
    %2429 = vmatpush1.bf16.msra.mxu0 %v1845
    %2430 = vmatprep.subr.bf16.mxu0 %v2200
    %2431 = vmatpush1.bf16.msra.mxu0 %v2197
    %2432 = vmatprep.subr.bf16.mxu0 0
    %2433 = vmatpush1.bf16.msra.mxu0 0
    %2434 = vmatprep.subr.bf16.mxu0 0
    %2435 = vmatpush1.bf16.msra.mxu0 0
    %2436 = vmatprep.subr.bf16.mxu0 0
    %2437 = vmatpush1.bf16.msra.mxu0 0
    %2438 = vmatprep.subr.bf16.mxu0 0
    %2439 = vmatpush1.bf16.msra.mxu0 0
    %2440 = vmatprep.subr.bf16.mxu0 0
    %2441 = vmatpush1.bf16.msra.mxu0 0
    %2442 = vmatprep.subr.bf16.mxu0 0
    %2443 = vmatpush1.bf16.msra.mxu0 0
    %2444 = vmatprep.subr.bf16.mxu0 0
    %2445 = vmatpush1.bf16.msra.mxu0 0
    %2446 = vmatprep.subr.bf16.mxu0 0
    %2447 = vmatpush1.bf16.msra.mxu0 0
    %2448 = vmatprep.subr.bf16.mxu0 0
    %2449 = vmatpush1.bf16.msra.mxu0 0
    %2450 = vmatprep.subr.bf16.mxu0 0
    %2451 = vmatpush1.bf16.msra.mxu0 0
    %2452 = vmatprep.subr.bf16.mxu0 0
    %2453 = vmatpush1.bf16.msra.mxu0 0
    %2454 = vmatprep.mubr.bf16.mxu0 0
    %2455 = vmatmul.mubr.bf16.gmra.mrb[0].mxu0 %v2187
    %v2456 = vpop.f32.mrb[0].mxu0
    %v2457 = vadd.f32 %v2416, %v2456
    %v2458 = vpop.f32.mrb[0].mxu0
    %v2459 = vadd.f32 %v2418, %v2458
    %v2460 = vpop.f32.mrb[0].mxu0
    %v2461 = vpop.f32.mrb[0].mxu0
    %2462 = vdwg.mxu0
    %2463 = vmatprep.subr.bf16.mxu0 %v1533
    %2464 = vmatpush1.bf16.msra.mxu0 %v1532
    %2465 = vmatprep.subr.bf16.mxu0 %v1542
    %2466 = vmatpush1.bf16.msra.mxu0 %v1541
    %2467 = vmatprep.subr.bf16.mxu0 %v1551
    %2468 = vmatpush1.bf16.msra.mxu0 %v1550
    %2469 = vmatprep.subr.bf16.mxu0 %v1560
    %2470 = vmatpush1.bf16.msra.mxu0 %v1559
    %2471 = vmatprep.subr.bf16.mxu0 %v1569
    %2472 = vmatpush1.bf16.msra.mxu0 %v1568
    %2473 = vmatprep.subr.bf16.mxu0 %v1578
    %2474 = vmatpush1.bf16.msra.mxu0 %v1577
    %2475 = vmatprep.subr.bf16.mxu0 %v1587
    %2476 = vmatpush1.bf16.msra.mxu0 %v1586
    %2477 = vmatprep.subr.bf16.mxu0 %v1596
    %2478 = vmatpush1.bf16.msra.mxu0 %v1595
    %2479 = vmatprep.subr.bf16.mxu0 %v1605
    %2480 = vmatpush1.bf16.msra.mxu0 %v1604
    %2481 = vmatprep.subr.bf16.mxu0 %v1614
    %2482 = vmatpush1.bf16.msra.mxu0 %v1613
    %2483 = vmatprep.subr.bf16.mxu0 %v1623
    %2484 = vmatpush1.bf16.msra.mxu0 %v1622
    %2485 = vmatprep.subr.bf16.mxu0 %v1632
    %2486 = vmatpush1.bf16.msra.mxu0 %v1631
    %2487 = vmatprep.subr.bf16.mxu0 %v1641
    %2488 = vmatpush1.bf16.msra.mxu0 %v1640
    %2489 = vmatprep.subr.bf16.mxu0 %v1650
    %2490 = vmatpush1.bf16.msra.mxu0 %v1649
    %2491 = vmatprep.subr.bf16.mxu0 %v1659
    %2492 = vmatpush1.bf16.msra.mxu0 %v1658
    %2493 = vmatprep.subr.bf16.mxu0 %v1668
    %2494 = vmatpush1.bf16.msra.mxu0 %v1667
    %2495 = vmatprep.mubr.bf16.mxu0 %v484
    %2496 = vmatmul.mubr.bf16.gmra.mrb[0].mxu0 %v483
    %v2497 = vpop.f32.mrb[0].mxu0
    %v2498 = vadd.f32 %v449, %v2497
    %v2499 = vpop.f32.mrb[0].mxu0
    %v2500 = vadd.f32 %v453, %v2499
    %v2501 = vpop.f32.mrb[0].mxu0
    %v2502 = vpop.f32.mrb[0].mxu0
    %2503 = vdwg.mxu0
    %2504 = vmatprep.subr.bf16.mxu0 %v1677
    %2505 = vmatpush1.bf16.msra.mxu0 %v1676
    %2506 = vmatprep.subr.bf16.mxu0 %v1686
    %2507 = vmatpush1.bf16.msra.mxu0 %v1685
    %2508 = vmatprep.subr.bf16.mxu0 %v1695
    %2509 = vmatpush1.bf16.msra.mxu0 %v1694
    %2510 = vmatprep.subr.bf16.mxu0 %v1704
    %2511 = vmatpush1.bf16.msra.mxu0 %v1703
    %2512 = vmatprep.subr.bf16.mxu0 %v1713
    %2513 = vmatpush1.bf16.msra.mxu0 %v1712
    %2514 = vmatprep.subr.bf16.mxu0 %v1722
    %2515 = vmatpush1.bf16.msra.mxu0 %v1721
    %2516 = vmatprep.subr.bf16.mxu0 %v1731
    %2517 = vmatpush1.bf16.msra.mxu0 %v1730
    %2518 = vmatprep.subr.bf16.mxu0 %v1740
    %2519 = vmatpush1.bf16.msra.mxu0 %v1739
    %2520 = vmatprep.subr.bf16.mxu0 %v1749
    %2521 = vmatpush1.bf16.msra.mxu0 %v1748
    %2522 = vmatprep.subr.bf16.mxu0 %v1758
    %2523 = vmatpush1.bf16.msra.mxu0 %v1757
    %2524 = vmatprep.subr.bf16.mxu0 %v1767
    %2525 = vmatpush1.bf16.msra.mxu0 %v1766
    %2526 = vmatprep.subr.bf16.mxu0 %v1776
    %2527 = vmatpush1.bf16.msra.mxu0 %v1775
    %2528 = vmatprep.subr.bf16.mxu0 %v1785
    %2529 = vmatpush1.bf16.msra.mxu0 %v1784
    %2530 = vmatprep.subr.bf16.mxu0 %v1794
    %2531 = vmatpush1.bf16.msra.mxu0 %v1793
    %2532 = vmatprep.subr.bf16.mxu0 %v1803
    %2533 = vmatpush1.bf16.msra.mxu0 %v1802
    %2534 = vmatprep.subr.bf16.mxu0 %v1812
    %2535 = vmatpush1.bf16.msra.mxu0 %v1811
    %2536 = vmatprep.mubr.bf16.mxu0 %v486
    %2537 = vmatmul.mubr.bf16.gmra.mrb[0].mxu0 %v485
    %v2538 = vpop.f32.mrb[0].mxu0
    %v2539 = vadd.f32 %v2498, %v2538
    %v2540 = vpop.f32.mrb[0].mxu0
    %v2541 = vadd.f32 %v2500, %v2540
    %v2542 = vpop.f32.mrb[0].mxu0
    %v2543 = vpop.f32.mrb[0].mxu0
    %2544 = vdwg.mxu0
    %2545 = vmatprep.subr.bf16.mxu0 %v1821
    %2546 = vmatpush1.bf16.msra.mxu0 %v1820
    %2547 = vmatprep.subr.bf16.mxu0 %v1830
    %2548 = vmatpush1.bf16.msra.mxu0 %v1829
    %2549 = vmatprep.subr.bf16.mxu0 %v1839
    %2550 = vmatpush1.bf16.msra.mxu0 %v1838
    %2551 = vmatprep.subr.bf16.mxu0 %v1848
    %2552 = vmatpush1.bf16.msra.mxu0 %v1847
    %2553 = vmatprep.subr.bf16.mxu0 %v2206
    %2554 = vmatpush1.bf16.msra.mxu0 %v2203
    %2555 = vmatprep.subr.bf16.mxu0 0
    %2556 = vmatpush1.bf16.msra.mxu0 0
    %2557 = vmatprep.subr.bf16.mxu0 0
    %2558 = vmatpush1.bf16.msra.mxu0 0
    %2559 = vmatprep.subr.bf16.mxu0 0
    %2560 = vmatpush1.bf16.msra.mxu0 0
    %2561 = vmatprep.subr.bf16.mxu0 0
    %2562 = vmatpush1.bf16.msra.mxu0 0
    %2563 = vmatprep.subr.bf16.mxu0 0
    %2564 = vmatpush1.bf16.msra.mxu0 0
    %2565 = vmatprep.subr.bf16.mxu0 0
    %2566 = vmatpush1.bf16.msra.mxu0 0
    %2567 = vmatprep.subr.bf16.mxu0 0
    %2568 = vmatpush1.bf16.msra.mxu0 0
    %2569 = vmatprep.subr.bf16.mxu0 0
    %2570 = vmatpush1.bf16.msra.mxu0 0
    %2571 = vmatprep.subr.bf16.mxu0 0
    %2572 = vmatpush1.bf16.msra.mxu0 0
    %2573 = vmatprep.subr.bf16.mxu0 0
    %2574 = vmatpush1.bf16.msra.mxu0 0
    %2575 = vmatprep.subr.bf16.mxu0 0
    %2576 = vmatpush1.bf16.msra.mxu0 0
    %2577 = vmatprep.mubr.bf16.mxu0 0
    %2578 = vmatmul.mubr.bf16.gmra.mrb[0].mxu0 %v2187
    %v2579 = vpop.f32.mrb[0].mxu0
    %v2580 = vadd.f32 %v2539, %v2579
    %v2581 = vpop.f32.mrb[0].mxu0
    %v2582 = vadd.f32 %v2541, %v2581
    %v2583 = vpop.f32.mrb[0].mxu0
    %v2584 = vpop.f32.mrb[0].mxu0
    %2585 = vdwg.mxu0
    %2586 = vmatprep.subr.bf16.mxu0 %v1535
    %2587 = vmatpush1.bf16.msra.mxu0 %v1534
    %2588 = vmatprep.subr.bf16.mxu0 %v1544
    %2589 = vmatpush1.bf16.msra.mxu0 %v1543
    %2590 = vmatprep.subr.bf16.mxu0 %v1553
    %2591 = vmatpush1.bf16.msra.mxu0 %v1552
    %2592 = vmatprep.subr.bf16.mxu0 %v1562
    %2593 = vmatpush1.bf16.msra.mxu0 %v1561
    %2594 = vmatprep.subr.bf16.mxu0 %v1571
    %2595 = vmatpush1.bf16.msra.mxu0 %v1570
    %2596 = vmatprep.subr.bf16.mxu0 %v1580
    %2597 = vmatpush1.bf16.msra.mxu0 %v1579
    %2598 = vmatprep.subr.bf16.mxu0 %v1589
    %2599 = vmatpush1.bf16.msra.mxu0 %v1588
    %2600 = vmatprep.subr.bf16.mxu0 %v1598
    %2601 = vmatpush1.bf16.msra.mxu0 %v1597
    %2602 = vmatprep.subr.bf16.mxu0 %v1607
    %2603 = vmatpush1.bf16.msra.mxu0 %v1606
    %2604 = vmatprep.subr.bf16.mxu0 %v1616
    %2605 = vmatpush1.bf16.msra.mxu0 %v1615
    %2606 = vmatprep.subr.bf16.mxu0 %v1625
    %2607 = vmatpush1.bf16.msra.mxu0 %v1624
    %2608 = vmatprep.subr.bf16.mxu0 %v1634
    %2609 = vmatpush1.bf16.msra.mxu0 %v1633
    %2610 = vmatprep.subr.bf16.mxu0 %v1643
    %2611 = vmatpush1.bf16.msra.mxu0 %v1642
    %2612 = vmatprep.subr.bf16.mxu0 %v1652
    %2613 = vmatpush1.bf16.msra.mxu0 %v1651
    %2614 = vmatprep.subr.bf16.mxu0 %v1661
    %2615 = vmatpush1.bf16.msra.mxu0 %v1660
    %2616 = vmatprep.subr.bf16.mxu0 %v1670
    %2617 = vmatpush1.bf16.msra.mxu0 %v1669
    %2618 = vmatprep.mubr.bf16.mxu0 %v484
    %2619 = vmatmul.mubr.bf16.gmra.mrb[0].mxu0 %v483
    %v2620 = vpop.f32.mrb[0].mxu0
    %v2621 = vadd.f32 %v457, %v2620
    %v2622 = vpop.f32.mrb[0].mxu0
    %v2623 = vadd.f32 %v461, %v2622
    %v2624 = vpop.f32.mrb[0].mxu0
    %v2625 = vpop.f32.mrb[0].mxu0
    %2626 = vdwg.mxu0
    %2627 = vmatprep.subr.bf16.mxu0 %v1679
    %2628 = vmatpush1.bf16.msra.mxu0 %v1678
    %2629 = vmatprep.subr.bf16.mxu0 %v1688
    %2630 = vmatpush1.bf16.msra.mxu0 %v1687
    %2631 = vmatprep.subr.bf16.mxu0 %v1697
    %2632 = vmatpush1.bf16.msra.mxu0 %v1696
    %2633 = vmatprep.subr.bf16.mxu0 %v1706
    %2634 = vmatpush1.bf16.msra.mxu0 %v1705
    %2635 = vmatprep.subr.bf16.mxu0 %v1715
    %2636 = vmatpush1.bf16.msra.mxu0 %v1714
    %2637 = vmatprep.subr.bf16.mxu0 %v1724
    %2638 = vmatpush1.bf16.msra.mxu0 %v1723
    %2639 = vmatprep.subr.bf16.mxu0 %v1733
    %2640 = vmatpush1.bf16.msra.mxu0 %v1732
    %2641 = vmatprep.subr.bf16.mxu0 %v1742
    %2642 = vmatpush1.bf16.msra.mxu0 %v1741
    %2643 = vmatprep.subr.bf16.mxu0 %v1751
    %2644 = vmatpush1.bf16.msra.mxu0 %v1750
    %2645 = vmatprep.subr.bf16.mxu0 %v1760
    %2646 = vmatpush1.bf16.msra.mxu0 %v1759
    %2647 = vmatprep.subr.bf16.mxu0 %v1769
    %2648 = vmatpush1.bf16.msra.mxu0 %v1768
    %2649 = vmatprep.subr.bf16.mxu0 %v1778
    %2650 = vmatpush1.bf16.msra.mxu0 %v1777
    %2651 = vmatprep.subr.bf16.mxu0 %v1787
    %2652 = vmatpush1.bf16.msra.mxu0 %v1786
    %2653 = vmatprep.subr.bf16.mxu0 %v1796
    %2654 = vmatpush1.bf16.msra.mxu0 %v1795
    %2655 = vmatprep.subr.bf16.mxu0 %v1805
    %2656 = vmatpush1.bf16.msra.mxu0 %v1804
    %2657 = vmatprep.subr.bf16.mxu0 %v1814
    %2658 = vmatpush1.bf16.msra.mxu0 %v1813
    %2659 = vmatprep.mubr.bf16.mxu0 %v486
    %2660 = vmatmul.mubr.bf16.gmra.mrb[0].mxu0 %v485
    %v2661 = vpop.f32.mrb[0].mxu0
    %v2662 = vadd.f32 %v2621, %v2661
    %v2663 = vpop.f32.mrb[0].mxu0
    %v2664 = vadd.f32 %v2623, %v2663
    %v2665 = vpop.f32.mrb[0].mxu0
    %v2666 = vpop.f32.mrb[0].mxu0
    %2667 = vdwg.mxu0
    %2668 = vmatprep.subr.bf16.mxu0 %v1823
    %2669 = vmatpush1.bf16.msra.mxu0 %v1822
    %2670 = vmatprep.subr.bf16.mxu0 %v1832
    %2671 = vmatpush1.bf16.msra.mxu0 %v1831
    %2672 = vmatprep.subr.bf16.mxu0 %v1841
    %2673 = vmatpush1.bf16.msra.mxu0 %v1840
    %2674 = vmatprep.subr.bf16.mxu0 %v1850
    %2675 = vmatpush1.bf16.msra.mxu0 %v1849
    %2676 = vmatprep.subr.bf16.mxu0 %v2212
    %2677 = vmatpush1.bf16.msra.mxu0 %v2209
    %2678 = vmatprep.subr.bf16.mxu0 0
    %2679 = vmatpush1.bf16.msra.mxu0 0
    %2680 = vmatprep.subr.bf16.mxu0 0
    %2681 = vmatpush1.bf16.msra.mxu0 0
    %2682 = vmatprep.subr.bf16.mxu0 0
    %2683 = vmatpush1.bf16.msra.mxu0 0
    %2684 = vmatprep.subr.bf16.mxu0 0
    %2685 = vmatpush1.bf16.msra.mxu0 0
    %2686 = vmatprep.subr.bf16.mxu0 0
    %2687 = vmatpush1.bf16.msra.mxu0 0
    %2688 = vmatprep.subr.bf16.mxu0 0
    %2689 = vmatpush1.bf16.msra.mxu0 0
    %2690 = vmatprep.subr.bf16.mxu0 0
    %2691 = vmatpush1.bf16.msra.mxu0 0
    %2692 = vmatprep.subr.bf16.mxu0 0
    %2693 = vmatpush1.bf16.msra.mxu0 0
    %2694 = vmatprep.subr.bf16.mxu0 0
    %2695 = vmatpush1.bf16.msra.mxu0 0
    %2696 = vmatprep.subr.bf16.mxu0 0
    %2697 = vmatpush1.bf16.msra.mxu0 0
    %2698 = vmatprep.subr.bf16.mxu0 0
    %2699 = vmatpush1.bf16.msra.mxu0 0
    %2700 = vmatprep.mubr.bf16.mxu0 0
    %2701 = vmatmul.mubr.bf16.gmra.mrb[0].mxu0 %v2187
    %v2702 = vpop.f32.mrb[0].mxu0
    %v2703 = vadd.f32 %v2662, %v2702
    %v2704 = vpop.f32.mrb[0].mxu0
    %v2705 = vadd.f32 %v2664, %v2704
    %v2706 = vpop.f32.mrb[0].mxu0
    %v2707 = vpop.f32.mrb[0].mxu0
    %2708 = vdwg.mxu0
    %2709 = vmatprep.subr.bf16.mxu0 0
    %2710 = vmatpush1.bf16.msra.mxu0 %v1536
    %2711 = vmatprep.subr.bf16.mxu0 0
    %2712 = vmatpush1.bf16.msra.mxu0 %v1545
    %2713 = vmatprep.subr.bf16.mxu0 0
    %2714 = vmatpush1.bf16.msra.mxu0 %v1554
    %2715 = vmatprep.subr.bf16.mxu0 0
    %2716 = vmatpush1.bf16.msra.mxu0 %v1563
    %2717 = vmatprep.subr.bf16.mxu0 0
    %2718 = vmatpush1.bf16.msra.mxu0 %v1572
    %2719 = vmatprep.subr.bf16.mxu0 0
    %2720 = vmatpush1.bf16.msra.mxu0 %v1581
    %2721 = vmatprep.subr.bf16.mxu0 0
    %2722 = vmatpush1.bf16.msra.mxu0 %v1590
    %2723 = vmatprep.subr.bf16.mxu0 0
    %2724 = vmatpush1.bf16.msra.mxu0 %v1599
    %2725 = vmatprep.subr.bf16.mxu0 0
    %2726 = vmatpush1.bf16.msra.mxu0 %v1608
    %2727 = vmatprep.subr.bf16.mxu0 0
    %2728 = vmatpush1.bf16.msra.mxu0 %v1617
    %2729 = vmatprep.subr.bf16.mxu0 0
    %2730 = vmatpush1.bf16.msra.mxu0 %v1626
    %2731 = vmatprep.subr.bf16.mxu0 0
    %2732 = vmatpush1.bf16.msra.mxu0 %v1635
    %2733 = vmatprep.subr.bf16.mxu0 0
    %2734 = vmatpush1.bf16.msra.mxu0 %v1644
    %2735 = vmatprep.subr.bf16.mxu0 0
    %2736 = vmatpush1.bf16.msra.mxu0 %v1653
    %2737 = vmatprep.subr.bf16.mxu0 0
    %2738 = vmatpush1.bf16.msra.mxu0 %v1662
    %2739 = vmatprep.subr.bf16.mxu0 0
    %2740 = vmatpush1.bf16.msra.mxu0 %v1671
    %2741 = vmatprep.mubr.bf16.mxu0 %v484
    %2742 = vmatmul.mubr.bf16.gmra.mrb[0].mxu0 %v483
    %v2743 = vpop.f32.mrb[0].mxu0
    %v2744 = vadd.f32 %v465, %v2743
    %v2745 = vpop.f32.mrb[0].mxu0
    %v2746 = vpop.f32.mrb[0].mxu0
    %v2747 = vpop.f32.mrb[0].mxu0
    %2748 = vdwg.mxu0
    %2749 = vmatprep.subr.bf16.mxu0 0
    %2750 = vmatpush1.bf16.msra.mxu0 %v1680
    %2751 = vmatprep.subr.bf16.mxu0 0
    %2752 = vmatpush1.bf16.msra.mxu0 %v1689
    %2753 = vmatprep.subr.bf16.mxu0 0
    %2754 = vmatpush1.bf16.msra.mxu0 %v1698
    %2755 = vmatprep.subr.bf16.mxu0 0
    %2756 = vmatpush1.bf16.msra.mxu0 %v1707
    %2757 = vmatprep.subr.bf16.mxu0 0
    %2758 = vmatpush1.bf16.msra.mxu0 %v1716
    %2759 = vmatprep.subr.bf16.mxu0 0
    %2760 = vmatpush1.bf16.msra.mxu0 %v1725
    %2761 = vmatprep.subr.bf16.mxu0 0
    %2762 = vmatpush1.bf16.msra.mxu0 %v1734
    %2763 = vmatprep.subr.bf16.mxu0 0
    %2764 = vmatpush1.bf16.msra.mxu0 %v1743
    %2765 = vmatprep.subr.bf16.mxu0 0
    %2766 = vmatpush1.bf16.msra.mxu0 %v1752
    %2767 = vmatprep.subr.bf16.mxu0 0
    %2768 = vmatpush1.bf16.msra.mxu0 %v1761
    %2769 = vmatprep.subr.bf16.mxu0 0
    %2770 = vmatpush1.bf16.msra.mxu0 %v1770
    %2771 = vmatprep.subr.bf16.mxu0 0
    %2772 = vmatpush1.bf16.msra.mxu0 %v1779
    %2773 = vmatprep.subr.bf16.mxu0 0
    %2774 = vmatpush1.bf16.msra.mxu0 %v1788
    %2775 = vmatprep.subr.bf16.mxu0 0
    %2776 = vmatpush1.bf16.msra.mxu0 %v1797
    %2777 = vmatprep.subr.bf16.mxu0 0
    %2778 = vmatpush1.bf16.msra.mxu0 %v1806
    %2779 = vmatprep.subr.bf16.mxu0 0
    %2780 = vmatpush1.bf16.msra.mxu0 %v1815
    %2781 = vmatprep.mubr.bf16.mxu0 %v486
    %2782 = vmatmul.mubr.bf16.gmra.mrb[0].mxu0 %v485
    %v2783 = vpop.f32.mrb[0].mxu0
    %v2784 = vadd.f32 %v2744, %v2783
    %v2785 = vpop.f32.mrb[0].mxu0
    %v2786 = vpop.f32.mrb[0].mxu0
    %v2787 = vpop.f32.mrb[0].mxu0
    %2788 = vdwg.mxu0
    %2789 = vmatprep.subr.bf16.mxu0 0
    %2790 = vmatpush1.bf16.msra.mxu0 %v1824
    %2791 = vmatprep.subr.bf16.mxu0 0
    %2792 = vmatpush1.bf16.msra.mxu0 %v1833
    %2793 = vmatprep.subr.bf16.mxu0 0
    %2794 = vmatpush1.bf16.msra.mxu0 %v1842
    %2795 = vmatprep.subr.bf16.mxu0 0
    %2796 = vmatpush1.bf16.msra.mxu0 %v1851
    %2797 = vmatprep.subr.bf16.mxu0 0
    %2798 = vmatpush1.bf16.msra.mxu0 %v2215
    %2799 = vmatprep.subr.bf16.mxu0 0
    %2800 = vmatpush1.bf16.msra.mxu0 0
    %2801 = vmatprep.subr.bf16.mxu0 0
    %2802 = vmatpush1.bf16.msra.mxu0 0
    %2803 = vmatprep.subr.bf16.mxu0 0
    %2804 = vmatpush1.bf16.msra.mxu0 0
    %2805 = vmatprep.subr.bf16.mxu0 0
    %2806 = vmatpush1.bf16.msra.mxu0 0
    %2807 = vmatprep.subr.bf16.mxu0 0
    %2808 = vmatpush1.bf16.msra.mxu0 0
    %2809 = vmatprep.subr.bf16.mxu0 0
    %2810 = vmatpush1.bf16.msra.mxu0 0
    %2811 = vmatprep.subr.bf16.mxu0 0
    %2812 = vmatpush1.bf16.msra.mxu0 0
    %2813 = vmatprep.subr.bf16.mxu0 0
    %2814 = vmatpush1.bf16.msra.mxu0 0
    %2815 = vmatprep.subr.bf16.mxu0 0
    %2816 = vmatpush1.bf16.msra.mxu0 0
    %2817 = vmatprep.subr.bf16.mxu0 0
    %2818 = vmatpush1.bf16.msra.mxu0 0
    %2819 = vmatprep.subr.bf16.mxu0 0
    %2820 = vmatpush1.bf16.msra.mxu0 0
    %2821 = vmatprep.mubr.bf16.mxu0 0
    %2822 = vmatmul.mubr.bf16.gmra.mrb[0].mxu0 %v2187
    %v2823 = vpop.f32.mrb[0].mxu0
    %v2824 = vadd.f32 %v2784, %v2823
    %v2825 = vpop.f32.mrb[0].mxu0
    %v2826 = vpop.f32.mrb[0].mxu0
    %v2827 = vpop.f32.mrb[0].mxu0
    %2828 = vdwg.mxu0
    %2829 = vst [vmem:[#allocation8] sm:$0xff] %v2334
    %2830 = vst [vmem:[#allocation8 + $0x8] sm:$0xff] %v2336
    %2831 = vst [vmem:[#allocation8 + $0x10] sm:$0xff] %v2457
    %2832 = vst [vmem:[#allocation8 + $0x18] sm:$0xff] %v2459
    %2833 = vst [vmem:[#allocation8 + $0x20] sm:$0xff] %v2580
    %2834 = vst [vmem:[#allocation8 + $0x28] sm:$0xff] %v2582
    %2835 = vst [vmem:[#allocation8 + $0x30] sm:$0xff] %v2703
    %2836 = vst [vmem:[#allocation8 + $0x38] sm:$0xff] %v2705
    %2837 = vst [vmem:[#allocation8 + $0x40] sm:$0xff] %v2824
    // Predicated region
    $region26: #{tpu_custom_call.1} parent=1 // pred_check
      _
    $region27: #{tpu_custom_call.1} parent=1 // pred_check_branch
      %2839 = sbr.rel (0) target = $region29
    $region28: #{tpu_custom_call.1} parent=1 // pred_region
      %s2841 = ssub.s32 1152, 1152
      %2842 = vsyncadd [#allocation4], %s2841
      %s2844 = sshll.u32 [#allocation8], 4
      %s2845 = int_to_ptr.vmem [resolvable:$true] %s2844
      %2847 = dma.vmem_to_hbm [thread:$0]  %s2845, 1152, %s3, [#allocation4]
    $region29: #{tpu_custom_call.1} parent=1 // pred_fallthru
      _
    // Predicated region
    $region30: #{tpu_custom_call.1} parent=1 // pred_check
      _
    $region31: #{tpu_custom_call.1} parent=1 // pred_check_branch
      %2849 = sbr.rel (0) target = $region33
    $region32: #{tpu_custom_call.1} parent=1 // pred_region
      %2850 = dma.done [#allocation4], 1152
    $region33: #{tpu_custom_call.1} parent=1 // pred_fallthru
      _
    %2851 = vsyncpa [#allocation3], 1
    %2852 = vsyncpa [#allocation6], 1
    %2853 = vsyncpa [#allocation4], 1

</llo_original>
